<compile_context>
chip_gen: v7x
topology: tpu7x:2x2x1
jax: 0.10.0
libtpu: 0.0.40
codegen_flags: <defaults>
</compile_context>

<pallas_src>
import functools

import jax
import jax.numpy as jnp
from jax.experimental import pallas as pl
from jax.experimental.pallas import tpu as pltpu

LANE = 128  # router logits padded to one full lane tile


# --------------------------- VMEM / tile selection ---------------------------

def _vmem_limit_bytes():
    """Generation-aware scoped-VMEM budget (~85% of per-core physical VMEM)."""
    try:
        cap = int(pltpu.get_tpu_info().vmem_capacity_bytes)
    except Exception:
        cap = 64 * 1024 * 1024          # conservative (v7x-sized) fallback
    return max(32 * 1024 * 1024, min(int(cap * 0.85), 112 * 1024 * 1024))


def _moe_step_vmem_bytes(tm, tf, H, out_bytes):
    """Per-step VMEM footprint: double-buffered in/out blocks + f32 accumulator
    + implicit f32 temporaries (h [tm,2tf], g [tm,tf], partial [tm,H])."""
    wb = 2  # bf16 activations / weights
    x_blk = tm * H * wb * 2
    w13_blk = H * 2 * tf * wb * 2
    w2_blk = tf * H * wb * 2
    gw_blk = tm * 4 * 2
    out_blk = tm * H * out_bytes * 2
    acc = tm * H * 4
    temps = tm * (2 * tf + tf + H) * 4
    return x_blk + w13_blk + w2_blk + gw_blk + out_blk + acc + temps


def _select_tm(T, H, tf, out_bytes, vmem_limit):
    budget = int(vmem_limit * 0.7)
    candidates = (512, 384, 256, 192, 128, 64, 32, 16, 8)
    for tm in candidates:
        if T % tm:
            continue
        # Keep >= 2 token tiles when tm can still stay >= 128, so both v7x
        # TensorCores get work through the "parallel" token axis.
        if tm == T and T >= 256:
            continue
        if _moe_step_vmem_bytes(tm, tf, H, out_bytes) <= budget:
            return tm
    for tm in reversed(candidates):
        if T % tm == 0:
            return tm
    raise ValueError(f"T={T} must be a multiple of 8")


# --------------------------- router (gate + softmax) -------------------------

def _router_softmax_kernel(x_ref, gw_ref, p_ref, *, num_experts):
    # x: [tm, H] bf16, gw: [H, 128] bf16 (first num_experts columns real).
    logits = jnp.dot(x_ref[...], gw_ref[...],
                     preferred_element_type=jnp.float32)        # [tm, 128] f32
    lane = jax.lax.broadcasted_iota(jnp.int32, logits.shape, 1)
    logits = jnp.where(lane < num_experts, logits, -1e30)        # mask padding
    m = jnp.max(logits, axis=-1, keepdims=True)
    p = jnp.exp(logits - m)
    denom = jnp.sum(p, axis=-1, keepdims=True)
    # approx reciprocal is safe: the common per-token scale cancels in the
    # top-k renormalization downstream.
    p_ref[...] = p * pl.reciprocal(denom, approx=True)


def router_softmax(x_bf16, gate_w_pad, num_experts, tm):
    T, H = x_bf16.shape
    Ep = gate_w_pad.shape[1]
    ce = pl.CostEstimate(flops=2 * T * H * Ep, transcendentals=T * Ep,
                         bytes_accessed=T * H * 2 + H * Ep * 2 + T * Ep * 4)
    return pl.pallas_call(
        functools.partial(_router_softmax_kernel, num_experts=num_experts),
        out_shape=jax.ShapeDtypeStruct((T, Ep), jnp.float32),
        grid=(T // tm,),
        in_specs=[
            pl.BlockSpec((tm, H), lambda t: (t, 0)),
            pl.BlockSpec((H, Ep), lambda t: (0, 0)),
        ],
        out_specs=pl.BlockSpec((tm, Ep), lambda t: (t, 0)),
        compiler_params=pltpu.CompilerParams(
            dimension_semantics=("parallel",)),
        cost_estimate=ce,
    )(x_bf16, gate_w_pad)


# ------------------------------ fused MoE kernel -----------------------------

def _moe_expert_kernel(mask_ref, x_ref, w13_ref, w2_ref, gw_ref, o_ref,
                       acc_ref):
    # grid = (token_tiles, experts, ffn_tiles); mask_ref is scalar-prefetched
    # [n_t, E] int32 in SMEM.
    t = pl.program_id(0)
    e = pl.program_id(1)
    f = pl.program_id(2)

    @pl.when(jnp.logical_and(e == 0, f == 0))
    def _():
        acc_ref[...] = jnp.zeros_like(acc_ref)

    # Expert skipping: only spend MXU cycles if some token in this tile routed
    # to expert e. (Weight DMA still streams; see routed-MoE TODO in wrapper.)
    @pl.when(mask_ref[t, e] != 0)
    def _():
        x = x_ref[...]                                   # [tm, H] bf16
        w13 = w13_ref[0, 0]                              # [H, 2*tf] bf16 (contiguous tile)
        h = jnp.dot(x, w13, preferred_element_type=jnp.float32)  # one MXU pass
        tf = h.shape[-1] // 2                            # tf % 128 == 0 (asserted)
        h1 = h[:, :tf]
        h3 = h[:, tf:]
        g = (h1 * jax.nn.sigmoid(h1)) * h3               # SiLU(w1 x) * (w3 x), f32
        # Routing weight applied BEFORE the down-projection: scales a [tm, tf]
        # tensor instead of [tm, H] and keeps the acc update a pure add.
        g = g * gw_ref[0]                                # [tm, 1] broadcast
        acc_ref[...] += jnp.dot(g.astype(w2_ref.dtype), w2_ref[0],
                                preferred_element_type=jnp.float32)

    @pl.when(jnp.logical_and(e == pl.num_programs(1) - 1,
                             f == pl.num_programs(2) - 1))
    def _():
        o_ref[...] = acc_ref[...].astype(o_ref.dtype)


def mixtral_moe(x, params, *, num_experts, top_k, tf, tm=None, out_dtype=None):
    """x: [T, H] hidden_states. Returns [T, H] in out_dtype (default x.dtype)."""
    T, H = x.shape
    E = num_experts
    Fdim = params["w2"].shape[1]
    out_dtype = x.dtype if out_dtype is None else out_dtype
    out_bytes = jnp.dtype(out_dtype).itemsize

    # Divisibility guards (no silently dropped remainder tokens / ffn columns).
    assert H % LANE == 0, "hidden_size must be a multiple of 128"
    assert tf % LANE == 0 and Fdim % tf == 0, "tf must be lane-aligned and divide F"

    vmem_limit = _vmem_limit_bytes()
    if tm is None:
        tm = _select_tm(T, H, tf, out_bytes, vmem_limit)
    assert T % tm == 0 and tm % 8 == 0, "T must be a multiple of tm (multiple of 8)"

    x_bf16 = x.astype(jnp.bfloat16)

    # ---- router: softmax(gate(x)) -> top-k -> renormalize (glue is tiny) ----
    probs = router_softmax(x_bf16, params["gate_w_pad"], E, tm)   # [T,128] f32
    top_w, top_idx = jax.lax.top_k(probs[:, :E], top_k)
    top_w = top_w / jnp.sum(top_w, axis=-1, keepdims=True)
    onehot = jax.nn.one_hot(top_idx, E, dtype=jnp.float32)        # [T, k, E]
    dense_w = jnp.einsum("tk,tke->te", top_w, onehot)             # [T, E]
    gw = dense_w.T.reshape(E, T, 1)                               # [E, T, 1]

    n_t = T // tm
    n_f = Fdim // tf
    # Which (token-tile, expert) pairs actually do work.
    tile_mask = (dense_w.reshape(n_t, tm, E) > 0).any(axis=1).astype(jnp.int32)

    ce = pl.CostEstimate(
        flops=6 * T * H * Fdim * E,
        transcendentals=T * Fdim * E,
        bytes_accessed=(n_t * E * 3 * H * Fdim * 2        # weight restream per token tile
                        + T * H * 2 + T * H * out_bytes + T * E * 4))

    # ---- fused expert GEMMs with expert/ffn reduction grid ----
    out = pl.pallas_call(
        _moe_expert_kernel,
        out_shape=jax.ShapeDtypeStruct((T, H), out_dtype),
        grid_spec=pltpu.PrefetchScalarGridSpec(
            num_scalar_prefetch=1,
            grid=(n_t, E, n_f),
            in_specs=[
                pl.BlockSpec((tm, H), lambda t, e, f, m: (t, 0)),            # tokens
                pl.BlockSpec((1, 1, H, 2 * tf),
                             lambda t, e, f, m: (e, f, 0, 0)),               # w1|w3 tile (contiguous)
                pl.BlockSpec((1, tf, H), lambda t, e, f, m: (e, f, 0)),      # w2 tile (contiguous)
                pl.BlockSpec((1, tm, 1), lambda t, e, f, m: (e, t, 0)),      # routing weight
            ],
            out_specs=pl.BlockSpec((tm, H), lambda t, e, f, m: (t, 0)),
            scratch_shapes=[pltpu.VMEM((tm, H), jnp.float32)]),
        compiler_params=pltpu.CompilerParams(
            dimension_semantics=("parallel", "arbitrary", "arbitrary"),
            vmem_limit_bytes=vmem_limit,
        ),
        cost_estimate=ce,
    )(tile_mask, x_bf16, params["w13"], params["w2"], gw)
    # TODO(synk): tensor_model_parallel_all_reduce is a no-op at tp_size=1.
    # TODO(synk): routed/grouped MoE (token sort + scalar-prefetched group
    # offsets in the LHS index_map) would eliminate the dense-masked FLOP and
    # weight-restreaming waste for prefill-sized T.
    return out


# ------------------------------ parameter setup ------------------------------

def pack_w13(w1, w3, tf):
    """Tile-major packing: w13[e, f] is the contiguous [H, 2*tf] block
    (w1 tile | w3 tile) consumed by ffn grid step f (one contiguous HBM read)."""
    E, H, Fdim = w1.shape
    assert Fdim % tf == 0
    n_f = Fdim // tf
    w1t = w1.reshape(E, H, n_f, tf).transpose(0, 2, 1, 3)   # [E, n_f, H, tf]
    w3t = w3.reshape(E, H, n_f, tf).transpose(0, 2, 1, 3)   # [E, n_f, H, tf]
    return jnp.concatenate([w1t, w3t], axis=-1)             # [E, n_f, H, 2*tf]


def init_params(key, *, num_experts, hidden_size, intermediate_size, tf):
    E, H, Fdim = num_experts, hidden_size, intermediate_size
    k1, k2, k3, k4 = jax.random.split(key, 4)
    s = 0.05
    w1 = s * jax.random.normal(k1, (E, H, Fdim), jnp.float32)
    w3 = s * jax.random.normal(k2, (E, H, Fdim), jnp.float32)
    w2 = s * jax.random.normal(k3, (E, Fdim, H), jnp.float32)
    gate = s * jax.random.normal(k4, (H, E), jnp.float32)
    gate_pad = jnp.zeros((H, LANE), jnp.float32).at[:, :E].set(gate)
    # TODO(synk): on v7x, fp8 expert weights (bf16 activations, f32 acc) would
    # halve weight HBM traffic; kept bf16 here for v5e/v6e portability.
    return {
        "w13": pack_w13(w1, w3, tf).astype(jnp.bfloat16),   # [E, n_f, H, 2*tf]
        "w2": w2.astype(jnp.bfloat16),                      # [E, Fdim, H]
        "gate_w_pad": gate_pad.astype(jnp.bfloat16),        # [H, 128]
    }


# ------------------------------ pure-JAX reference ---------------------------

def moe_reference(x, params, *, num_experts, top_k, tf):
    E = num_experts
    H = x.shape[1]
    Fdim = params["w2"].shape[1]
    xb = x.astype(jnp.bfloat16)
    gate = params["gate_w_pad"][:, :E]
    logits = jnp.dot(xb, gate, preferred_element_type=jnp.float32)
    probs = jax.nn.softmax(logits, axis=-1)
    top_w, top_idx = jax.lax.top_k(probs, top_k)
    top_w = top_w / jnp.sum(top_w, axis=-1, keepdims=True)
    dense_w = jnp.einsum("tk,tke->te", top_w,
                         jax.nn.one_hot(top_idx, E, dtype=jnp.float32))
    w13 = params["w13"]                                   # [E, n_f, H, 2*tf]
    w1 = w13[..., :tf].transpose(0, 2, 1, 3).reshape(E, H, Fdim)
    w3 = w13[..., tf:].transpose(0, 2, 1, 3).reshape(E, H, Fdim)
    out = jnp.zeros(x.shape, jnp.float32)
    for e in range(E):
        h1 = jnp.dot(xb, w1[e], preferred_element_type=jnp.float32)
        h3 = jnp.dot(xb, w3[e], preferred_element_type=jnp.float32)
        g = (h1 * jax.nn.sigmoid(h1) * h3).astype(jnp.bfloat16)
        ye = jnp.dot(g, params["w2"][e], preferred_element_type=jnp.float32)
        out = out + ye * dense_w[:, e:e + 1]
    return out.astype(x.dtype)


# ----------------------------------- main ------------------------------------

if __name__ == "__main__":
    cfg = dict(hidden_size=128, intermediate_size=512, num_experts=8,
               top_k=2, tf=256)
    T = 256

    key = jax.random.PRNGKey(0)
    pkey, xkey = jax.random.split(key)
    params = init_params(pkey,
                         num_experts=cfg["num_experts"],
                         hidden_size=cfg["hidden_size"],
                         intermediate_size=cfg["intermediate_size"],
                         tf=cfg["tf"])
    x = jax.random.normal(xkey, (T, cfg["hidden_size"]), jnp.float32)

    moe_fn = jax.jit(functools.partial(
        mixtral_moe, num_experts=cfg["num_experts"], top_k=cfg["top_k"],
        tf=cfg["tf"]))
    out = jax.block_until_ready(moe_fn(x, params))

    ref = moe_reference(x, params, num_experts=cfg["num_experts"],
                        top_k=cfg["top_k"], tf=cfg["tf"])
    assert out.shape == (T, cfg["hidden_size"])
    assert bool(jnp.all(jnp.isfinite(out)))
    assert float(jnp.max(jnp.abs(out - ref))) < 5e-2
    print("KERNEL_OK")
</pallas_src>

<mosaic_0001>
module attributes {stable_mosaic.version = 11 : i64} {
  func.func @_router_softmax_kernel(%arg0: i32, %arg1: memref<128x128xbf16, #tpu.memory_space<vmem>>, %arg2: memref<128x128xbf16, #tpu.memory_space<vmem>>, %arg3: memref<128x128xf32, #tpu.memory_space<vmem>>) attributes {dimension_semantics = [#tpu.dimension_semantics<parallel>], iteration_bounds = array<i64: 2>, scalar_prefetch = 0 : i64, scratch_operands = 0 : i64, tpu.core_type = #tpu.core_type<tc>, window_params = [{transform_indices = @transform_0, window_bounds = array<i64: 128, 128>}, {pipeline_mode = #tpu.pipeline_mode<synchronous>, transform_indices = @transform_1, window_bounds = array<i64: 128, 128>}, {transform_indices = @transform_2, window_bounds = array<i64: 128, 128>}]} {
    %c0 = arith.constant 0 : index
    %c0_0 = arith.constant 0 : index
    %0 = vector.load %arg1[%c0, %c0_0] : memref<128x128xbf16, #tpu.memory_space<vmem>>, vector<128x128xbf16>
    %c0_1 = arith.constant 0 : index
    %c0_2 = arith.constant 0 : index
    %1 = vector.load %arg2[%c0_1, %c0_2] : memref<128x128xbf16, #tpu.memory_space<vmem>>, vector<128x128xbf16>
    %cst = arith.constant dense<0.000000e+00> : vector<128x128xf32>
    %2 = tpu.matmul %0, %1, %cst {dimension_numbers = #tpu.dot_dimension_numbers<[1], [0], [0], [1], [0, 0, 1, 1], [], []>} : vector<128x128xbf16>, vector<128x128xbf16>, vector<128x128xf32> -> vector<128x128xf32>
    %3 = tpu.iota {dimensions = array<i32: 1>} : vector<128x128xi32>
    %c8_i32 = arith.constant 8 : i32
    %4 = vector.broadcast %c8_i32 : i32 to vector<128x128xi32>
    %5 = arith.cmpi slt, %3, %4 : vector<128x128xi32>
    %cst_3 = arith.constant -1.000000e+30 : f32
    %6 = vector.broadcast %cst_3 : f32 to vector<128x128xf32>
    %7 = arith.select %5, %2, %6 : vector<128x128xi1>, vector<128x128xf32>
    %cst_4 = arith.constant dense<0xFF800000> : vector<128xf32>
    %8 = vector.multi_reduction <maximumf>, %7, %cst_4 [1] : vector<128x128xf32> to vector<128xf32>
    %9 = vector.shape_cast %8 : vector<128xf32> to vector<128x1xf32>
    %10 = vector.broadcast %9 : vector<128x1xf32> to vector<128x128xf32>
    %11 = arith.subf %7, %10 : vector<128x128xf32>
    %12 = math.exp %11 : vector<128x128xf32>
    %cst_5 = arith.constant dense<0.000000e+00> : vector<128xf32>
    %13 = vector.multi_reduction <add>, %12, %cst_5 [1] : vector<128x128xf32> to vector<128xf32>
    %14 = vector.shape_cast %13 : vector<128xf32> to vector<128x1xf32>
    %15 = tpu.reciprocal %14 {approx = true} : vector<128x1xf32> -> vector<128x1xf32>
    %16 = vector.broadcast %15 : vector<128x1xf32> to vector<128x128xf32>
    %17 = arith.mulf %12, %16 : vector<128x128xf32>
    %c0_6 = arith.constant 0 : index
    %c0_7 = arith.constant 0 : index
    %18 = vector.load %arg3[%c0_6, %c0_7] : memref<128x128xf32, #tpu.memory_space<vmem>>, vector<128x128xf32>
    tpu.vector_store %arg3[%c0_6, %c0_7], %17 {strides = array<i32>} : memref<128x128xf32, #tpu.memory_space<vmem>>, vector<128x128xf32>,
    return
  }
  func.func @transform_0(%arg0: i32) -> (i32, i32) {
    %c0_i32 = arith.constant 0 : i32
    %c0_i32_0 = arith.constant 0 : i32
    return %arg0, %c0_i32 : i32, i32
  }
  func.func @transform_1(%arg0: i32) -> (i32, i32) {
    %c0_i32 = arith.constant 0 : i32
    %c0_i32_0 = arith.constant 0 : i32
    %c0_i32_1 = arith.constant 0 : i32
    return %c0_i32, %c0_i32_0 : i32, i32
  }
  func.func @transform_2(%arg0: i32) -> (i32, i32) {
    %c0_i32 = arith.constant 0 : i32
    %c0_i32_0 = arith.constant 0 : i32
    return %arg0, %c0_i32 : i32, i32
  }
}

module attributes {stable_mosaic.version = 11 : i64} {
  func.func @_moe_expert_kernel(%arg0: i32, %arg1: i32, %arg2: i32, %arg3: memref<2x8xi32, #tpu.memory_space<smem>>, %arg4: memref<128x128xbf16, #tpu.memory_space<vmem>>, %arg5: memref<1x1x128x512xbf16, #tpu.memory_space<vmem>>, %arg6: memref<1x256x128xbf16, #tpu.memory_space<vmem>>, %arg7: memref<1x128x1xf32, #tpu.memory_space<vmem>>, %arg8: memref<128x128xf32, #tpu.memory_space<vmem>>, %arg9: memref<128x128xf32, #tpu.memory_space<vmem>>) attributes {dimension_semantics = [#tpu.dimension_semantics<parallel>, #tpu.dimension_semantics<arbitrary>, #tpu.dimension_semantics<arbitrary>], iteration_bounds = array<i64: 2, 8, 2>, scalar_prefetch = 1 : i64, scratch_operands = 1 : i64, tpu.core_type = #tpu.core_type<tc>, window_params = [{transform_indices = @transform_0, window_bounds = array<i64: 128, 128>}, {transform_indices = @transform_1, window_bounds = array<i64: 1, 1, 128, 512>}, {transform_indices = @transform_2, window_bounds = array<i64: 1, 256, 128>}, {transform_indices = @transform_3, window_bounds = array<i64: 1, 128, 1>}, {transform_indices = @transform_4, window_bounds = array<i64: 128, 128>}]} {
    %c0_i32 = arith.constant 0 : i32
    %0 = arith.cmpi eq, %arg1, %c0_i32 : i32
    %c0_i32_0 = arith.constant 0 : i32
    %1 = arith.cmpi eq, %arg2, %c0_i32_0 : i32
    %2 = arith.andi %0, %1 : i1
    %3 = arith.extui %2 : i1 to i32
    %c0_i32_1 = arith.constant 0 : i32
    %4 = arith.cmpi ne, %3, %c0_i32_1 : i32
    scf.if %4 {
      %cst = arith.constant 0.000000e+00 : f32
      %16 = vector.broadcast %cst : f32 to vector<128x128xf32>
      %c0 = arith.constant 0 : index
      %c0_5 = arith.constant 0 : index
      %17 = vector.load %arg9[%c0, %c0_5] : memref<128x128xf32, #tpu.memory_space<vmem>>, vector<128x128xf32>
      tpu.vector_store %arg9[%c0, %c0_5], %16 {strides = array<i32>} : memref<128x128xf32, #tpu.memory_space<vmem>>, vector<128x128xf32>,
    } else {
    }
    %5 = arith.index_cast %arg0 : i32 to index
    %6 = arith.index_cast %arg1 : i32 to index
    %7 = memref.load %arg3[%5, %6] : memref<2x8xi32, #tpu.memory_space<smem>>
    %c0_i32_2 = arith.constant 0 : i32
    %8 = arith.cmpi ne, %7, %c0_i32_2 : i32
    %9 = arith.extui %8 : i1 to i32
    %c0_i32_3 = arith.constant 0 : i32
    %10 = arith.cmpi ne, %9, %c0_i32_3 : i32
    scf.if %10 {
      %c0 = arith.constant 0 : index
      %c0_5 = arith.constant 0 : index
      %16 = vector.load %arg4[%c0, %c0_5] : memref<128x128xbf16, #tpu.memory_space<vmem>>, vector<128x128xbf16>
      %c0_6 = arith.constant 0 : index
      %c0_7 = arith.constant 0 : index
      %c0_8 = arith.constant 0 : index
      %c0_9 = arith.constant 0 : index
      %17 = vector.load %arg5[%c0_6, %c0_7, %c0_8, %c0_9] : memref<1x1x128x512xbf16, #tpu.memory_space<vmem>>, vector<1x1x128x512xbf16>
      %18 = vector.shape_cast %17 : vector<1x1x128x512xbf16> to vector<128x512xbf16>
      %cst = arith.constant dense<0.000000e+00> : vector<128x512xf32>
      %19 = tpu.matmul %16, %18, %cst {dimension_numbers = #tpu.dot_dimension_numbers<[1], [0], [0], [1], [0, 0, 1, 1], [], []>} : vector<128x128xbf16>, vector<128x512xbf16>, vector<128x512xf32> -> vector<128x512xf32>
      %20 = vector.extract_strided_slice %19 {offsets = [0, 0], sizes = [128, 256], strides = [1, 1]} : vector<128x512xf32> to vector<128x256xf32>
      %21 = vector.extract_strided_slice %19 {offsets = [0, 256], sizes = [128, 256], strides = [1, 1]} : vector<128x512xf32> to vector<128x256xf32>
      %22 = arith.negf %20 : vector<128x256xf32>
      %23 = math.exp %22 : vector<128x256xf32>
      %cst_10 = arith.constant 1.000000e+00 : f32
      %24 = vector.broadcast %cst_10 : f32 to vector<128x256xf32>
      %25 = arith.addf %24, %23 : vector<128x256xf32>
      %26 = arith.divf %24, %25 : vector<128x256xf32>
      %27 = arith.mulf %20, %26 : vector<128x256xf32>
      %28 = arith.mulf %27, %21 : vector<128x256xf32>
      %c0_11 = arith.constant 0 : index
      %c0_12 = arith.constant 0 : index
      %c0_13 = arith.constant 0 : index
      %29 = vector.load %arg7[%c0_11, %c0_12, %c0_13] : memref<1x128x1xf32, #tpu.memory_space<vmem>>, vector<1x128x1xf32>
      %30 = vector.shape_cast %29 : vector<1x128x1xf32> to vector<128x1xf32>
      %31 = vector.broadcast %30 : vector<128x1xf32> to vector<128x256xf32>
      %32 = arith.mulf %28, %31 : vector<128x256xf32>
      %c0_14 = arith.constant 0 : index
      %c0_15 = arith.constant 0 : index
      %33 = vector.load %arg9[%c0_14, %c0_15] : memref<128x128xf32, #tpu.memory_space<vmem>>, vector<128x128xf32>
      %34 = arith.truncf %32 : vector<128x256xf32> to vector<128x256xbf16>
      %c0_16 = arith.constant 0 : index
      %c0_17 = arith.constant 0 : index
      %c0_18 = arith.constant 0 : index
      %35 = vector.load %arg6[%c0_16, %c0_17, %c0_18] : memref<1x256x128xbf16, #tpu.memory_space<vmem>>, vector<1x256x128xbf16>
      %36 = vector.shape_cast %35 : vector<1x256x128xbf16> to vector<256x128xbf16>
      %cst_19 = arith.constant dense<0.000000e+00> : vector<128x128xf32>
      %37 = tpu.matmul %34, %36, %cst_19 {dimension_numbers = #tpu.dot_dimension_numbers<[1], [0], [0], [1], [0, 0, 1, 1], [], []>} : vector<128x256xbf16>, vector<256x128xbf16>, vector<128x128xf32> -> vector<128x128xf32>
      %38 = arith.addf %33, %37 : vector<128x128xf32>
      %c0_20 = arith.constant 0 : index
      %c0_21 = arith.constant 0 : index
      %39 = vector.load %arg9[%c0_20, %c0_21] : memref<128x128xf32, #tpu.memory_space<vmem>>, vector<128x128xf32>
      tpu.vector_store %arg9[%c0_20, %c0_21], %38 {strides = array<i32>} : memref<128x128xf32, #tpu.memory_space<vmem>>, vector<128x128xf32>,
    } else {
    }
    %c7_i32 = arith.constant 7 : i32
    %11 = arith.cmpi eq, %arg1, %c7_i32 : i32
    %c1_i32 = arith.constant 1 : i32
    %12 = arith.cmpi eq, %arg2, %c1_i32 : i32
    %13 = arith.andi %11, %12 : i1
    %14 = arith.extui %13 : i1 to i32
    %c0_i32_4 = arith.constant 0 : i32
    %15 = arith.cmpi ne, %14, %c0_i32_4 : i32
    scf.if %15 {
      %c0 = arith.constant 0 : index
      %c0_5 = arith.constant 0 : index
      %16 = vector.load %arg9[%c0, %c0_5] : memref<128x128xf32, #tpu.memory_space<vmem>>, vector<128x128xf32>
      %c0_6 = arith.constant 0 : index
      %c0_7 = arith.constant 0 : index
      %17 = vector.load %arg8[%c0_6, %c0_7] : memref<128x128xf32, #tpu.memory_space<vmem>>, vector<128x128xf32>
      tpu.vector_store %arg8[%c0_6, %c0_7], %16 {strides = array<i32>} : memref<128x128xf32, #tpu.memory_space<vmem>>, vector<128x128xf32>,
    } else {
    }
    return
  }
  func.func @transform_0(%arg0: i32, %arg1: i32, %arg2: i32, %arg3: memref<2x8xi32, #tpu.memory_space<smem>>) -> (i32, i32) {
    %c0_i32 = arith.constant 0 : i32
    %c0_i32_0 = arith.constant 0 : i32
    return %arg0, %c0_i32 : i32, i32
  }
  func.func @transform_1(%arg0: i32, %arg1: i32, %arg2: i32, %arg3: memref<2x8xi32, #tpu.memory_space<smem>>) -> (i32, i32, i32, i32) {
    %c0_i32 = arith.constant 0 : i32
    %c0_i32_0 = arith.constant 0 : i32
    %c0_i32_1 = arith.constant 0 : i32
    return %arg1, %arg2, %c0_i32, %c0_i32_0 : i32, i32, i32, i32
  }
  func.func @transform_2(%arg0: i32, %arg1: i32, %arg2: i32, %arg3: memref<2x8xi32, #tpu.memory_space<smem>>) -> (i32, i32, i32) {
    %c0_i32 = arith.constant 0 : i32
    %c0_i32_0 = arith.constant 0 : i32
    return %arg1, %arg2, %c0_i32 : i32, i32, i32
  }
  func.func @transform_3(%arg0: i32, %arg1: i32, %arg2: i32, %arg3: memref<2x8xi32, #tpu.memory_space<smem>>) -> (i32, i32, i32) {
    %c0_i32 = arith.constant 0 : i32
    %c0_i32_0 = arith.constant 0 : i32
    return %arg1, %arg0, %c0_i32 : i32, i32, i32
  }
  func.func @transform_4(%arg0: i32, %arg1: i32, %arg2: i32, %arg3: memref<2x8xi32, #tpu.memory_space<smem>>) -> (i32, i32) {
    %c0_i32 = arith.constant 0 : i32
    %c0_i32_0 = arith.constant 0 : i32
    return %arg0, %c0_i32 : i32, i32
  }
}

</mosaic_0001>

<llo_original>
// kernel: mixtral_moe.2
$region0: #{mixtral_moe.2}
  #allocation0 [shape = 'u32[]', space=smem, size = 0x4, offset = 0x4, fixed_abs, tag = 'smem constant byte address 0x4 - core index']
  #allocation1 [shape = 'u32[144,128]{1,0:T(1,128)}', space=vmem, size = 0x12000, scoped, tag = 'internal scratch']
  %s0 = inlined_call_operand.vmem [shape: bf16[256,128], index: 0, kind: input, shape index: {}]
  %s1 = inlined_call_operand.hbm [shape: bf16[128,128], index: 1, kind: input, shape index: {}]
  %s2 = inlined_call_operand.vmem [shape: f32[256,128], index: 2, kind: output, shape index: {}]
  %s3 = sld [smem:[#allocation0]]
  $region45: #{mixtral_moe.2} parent=0
    _
  %s5 = ssub.s32 1, %s3
  %s6 = scalar_select 0, %s5, %s3
  $region1: #{mixtral_moe.2} parent=0
    #allocation2 [shape = 'u8[32768]{0}', space=vmem, size = 0x8000, scoped, tag = 'input window, operand 1, single buffered']
    #allocation3 [shape = 's32[2]{0}', space=sflag, size = 0x8, scoped, tag = 'scoped memory for mixtral_moe.2']
    %7 = vsyncpa [#allocation3], 0
    loop: start=0, step=1, limit=4
    $region2: #{mixtral_moe.2} parent=1 // loop_pre_header
      _
    $region3: #{mixtral_moe.2} parent=1 // loop_header
      %s9 = sphi 0, %s13
      %p10 = scmp.ge.s32.totalorder %s9, 4
      %s19 = sphi 0, %s21
      %s22 = sphi 0, %s19
      %s23 = sphi 0, %s22
      %s39 = sphi 0, %s23
      %s43 = sphi 0, %s43
      %s45 = sphi 0, %s43
      %s46 = sphi 0, %s45
      %s60 = sphi 0, %s46
      %s66 = sphi 0, %s68
      %s69 = sphi 0, %s66
      %s70 = sphi 0, %s69
      %s86 = sphi 0, %s70
    $region4: #{mixtral_moe.2} parent=1 // loop_header_branch
      %12 = sbr.rel (%p10) target = $region8
    $region5: #{mixtral_moe.2} parent=1 // loop_body
      %s14 = ssub.s32 %s9, 1
      %s15 = ssub.s32 %s9, 2
      %s16 = sadd.s32 %s9, 1
      %s17 = ssub.s32 %s9, %s16
      %p18 = scmp.eq.s32.totalorder %s17, 0
      %s20 = sadd.s32 %s19, 1
      %s21 = scalar_select %p18, %s19, %s20
      %p24 = pneg %p18
      %p25 = scmp.eq.s32.totalorder %s9, 1
      %p26 = por %p24, %p25
      %p27 = scmp.ne.s32.totalorder %s19, %s22
      %p28 = scmp.eq.s32.totalorder %s9, 0
      %p29 = por %p27, %p28
      %p30 = scmp.ne.s32.totalorder %s19, %s22
      %p31 = scmp.eq.s32.totalorder %s14, 1
      %p32 = por %p30, %p31
      %p33 = scmp.ne.s32.totalorder %s22, %s23
      %p34 = scmp.eq.s32.totalorder %s14, 0
      %p35 = por %p33, %p34
      %p36 = scmp.ne.s32.totalorder %s22, %s23
      %p37 = scmp.eq.s32.totalorder %s15, 1
      %p38 = por %p36, %p37
      %p40 = scmp.ne.s32.totalorder %s23, %s39
      %p41 = scmp.eq.s32.totalorder %s15, 0
      %p42 = por %p40, %p41
      %s44 = sadd.s32 %s43, 1
      %p47 = scmp.eq.s32.totalorder %s9, 1
      %p48 = scmp.ne.s32.totalorder %s43, %s45
      %p49 = scmp.eq.s32.totalorder %s9, 0
      %p50 = por %p48, %p49
      %p51 = scmp.ne.s32.totalorder %s43, %s45
      %p52 = scmp.eq.s32.totalorder %s14, 1
      %p53 = por %p51, %p52
      %p54 = scmp.ne.s32.totalorder %s45, %s46
      %p55 = scmp.eq.s32.totalorder %s14, 0
      %p56 = por %p54, %p55
      %p57 = scmp.ne.s32.totalorder %s45, %s46
      %p58 = scmp.eq.s32.totalorder %s15, 1
      %p59 = por %p57, %p58
      %p61 = scmp.ne.s32.totalorder %s46, %s60
      %p62 = scmp.eq.s32.totalorder %s15, 0
      %p63 = por %p61, %p62
      %s64 = ssub.s32 %s9, %s16
      %p65 = scmp.eq.s32.totalorder %s64, 0
      %s67 = sadd.s32 %s66, 1
      %s68 = scalar_select %p65, %s66, %s67
      %p71 = pneg %p65
      %p72 = scmp.eq.s32.totalorder %s9, 1
      %p73 = por %p71, %p72
      %p74 = scmp.ne.s32.totalorder %s66, %s69
      %p75 = scmp.eq.s32.totalorder %s9, 0
      %p76 = por %p74, %p75
      %p77 = scmp.ne.s32.totalorder %s66, %s69
      %p78 = scmp.eq.s32.totalorder %s14, 1
      %p79 = por %p77, %p78
      %p80 = scmp.ne.s32.totalorder %s69, %s70
      %p81 = scmp.eq.s32.totalorder %s14, 0
      %p82 = por %p80, %p81
      %p83 = scmp.ne.s32.totalorder %s69, %s70
      %p84 = scmp.eq.s32.totalorder %s15, 1
      %p85 = por %p83, %p84
      %p87 = scmp.ne.s32.totalorder %s70, %s86
      %p88 = scmp.eq.s32.totalorder %s15, 0
      %p89 = por %p87, %p88
      %p90 = scmp.le.s32.totalorder 1, %s9
      %p91 = scmp.lt.s32.totalorder %s9, 3
      %p92 = pnand %p90, %p91
      %p93 = pneg %p92
      // Predicated region
      $region9: #{mixtral_moe.2} parent=5 // pred_check
        _
      $region10: #{mixtral_moe.2} parent=5 // pred_check_branch
        %95 = sbr.rel (%p92) target = $region12
      $region11: #{mixtral_moe.2} parent=5 // pred_region
        %s96 = ssub.s32 %s9, 1
        // Predicated region
        $region13: #{mixtral_moe.2} parent=11 // pred_check
          %p97 = pneg %p56
        $region14: #{mixtral_moe.2} parent=11 // pred_check_branch
          %99 = sbr.rel (%p97) target = $region16
        $region15: #{mixtral_moe.2} parent=11 // pred_region
          %s101 = ssub.s32 1024, 1024
          %102 = vsyncadd [#allocation3], %s101
          %s103 = sshll.u32 [#allocation2], 4
          %s104 = int_to_ptr.vmem [resolvable:$true] %s103
          %109 = dma.hbm_to_vmem [thread:$0]  %s1, 1024, %s104, [#allocation3], 64, 64, 4
        $region16: #{mixtral_moe.2} parent=11 // pred_fallthru
          _
      $region12: #{mixtral_moe.2} parent=5 // pred_fallthru
        _
      %p110 = scmp.lt.s32.totalorder %s9, 2
      // Predicated region
      $region17: #{mixtral_moe.2} parent=5 // pred_check
        %p111 = pneg %p110
      $region18: #{mixtral_moe.2} parent=5 // pred_check_branch
        %113 = sbr.rel (%p111) target = $region20
      $region19: #{mixtral_moe.2} parent=5 // pred_region
        // Predicated region
        $region21: #{mixtral_moe.2} parent=19 // pred_check
          %p114 = pneg %p29
        $region22: #{mixtral_moe.2} parent=19 // pred_check_branch
          %116 = sbr.rel (%p114) target = $region24
        $region23: #{mixtral_moe.2} parent=19 // pred_region
          %s117 = smul.u32 16, %s9
          %p118 = scmp.lt.s32.totalorder %s117, 31
          %s119 = scalar_select %p118, %s117, 31
          %s120 = smul.addr %s119, 4
          %s121 = scalar_lea.vmem %s0, %s120
          %s122 = smul.u32 16, %s9
        $region24: #{mixtral_moe.2} parent=19 // pred_fallthru
          _
      $region20: #{mixtral_moe.2} parent=5 // pred_fallthru
        _
      %p123 = scmp.le.s32.totalorder 1, %s9
      %p124 = scmp.lt.s32.totalorder %s9, 3
      %p125 = pnand %p123, %p124
      %p126 = pneg %p125
      // Predicated region
      $region25: #{mixtral_moe.2} parent=5 // pred_check
        _
      $region26: #{mixtral_moe.2} parent=5 // pred_check_branch
        %128 = sbr.rel (%p125) target = $region28
      $region27: #{mixtral_moe.2} parent=5 // pred_region
        %s129 = ssub.s32 %s9, 1
        // Predicated region
        $region29: #{mixtral_moe.2} parent=27 // pred_check
          %p130 = pneg %p56
        $region30: #{mixtral_moe.2} parent=27 // pred_check_branch
          %132 = sbr.rel (%p130) target = $region32
        $region31: #{mixtral_moe.2} parent=27 // pred_region
          %133 = dma.done [#allocation3], 1024
        $region32: #{mixtral_moe.2} parent=27 // pred_fallthru
          _
        %s134 = smul.u32 16, %s14
        %p135 = scmp.lt.s32.totalorder %s134, 31
        %s136 = scalar_select %p135, %s134, 31
        %s137 = smul.addr %s136, 4
        %s138 = scalar_lea.vmem %s0, %s137
        %p139 = pneg %p35
        %p140 = pneg %p32
        %p141 = pneg %p56
        %p142 = pneg %p53
        %p143 = pneg %p82
        %p144 = pneg %p79
        %s145 = smul.u32 16, %s14
        %p146 = scmp.lt.s32.totalorder %s145, 31
        %s147 = scalar_select %p146, %s145, 31
        %s148 = smul.addr %s147, 8
        %s149 = scalar_lea.vmem %s2, %s148
        %s150 = smul.u32 16, %s14
        %p151 = scmp.lt.s32.totalorder %s150, 31
        %s152 = scalar_select %p151, %s150, 31
        %s153 = smul.addr %s152, 4
        %s154 = scalar_lea.vmem %s0, %s153
        %s155 = smul.u32 16, %s14
        %s156 = smul.u32 16, %s14
        %p157 = scmp.lt.s32.totalorder %s156, 31
        %s158 = scalar_select %p157, %s156, 31
        %s159 = smul.addr %s158, 8
        %s160 = scalar_lea.vmem %s2, %s159
        %s161 = smul.u32 16, %s14
        %v163 = vld [vmem:[%s154] sm:$0xf]
        %v164 = vld [vmem:[%s154 + $0x4] sm:$0xf]
        %v165 = vld [vmem:[%s154 + $0x8] sm:$0xf]
        %v166 = vld [vmem:[%s154 + $0xc] sm:$0xf]
        %v167 = vld [vmem:[%s154 + $0x10] sm:$0xf]
        %v168 = vld [vmem:[%s154 + $0x14] sm:$0xf]
        %v169 = vld [vmem:[%s154 + $0x18] sm:$0xf]
        %v170 = vld [vmem:[%s154 + $0x1c] sm:$0xf]
        %v171 = vld [vmem:[%s154 + $0x20] sm:$0xf]
        %v172 = vld [vmem:[%s154 + $0x24] sm:$0xf]
        %v173 = vld [vmem:[%s154 + $0x28] sm:$0xf]
        %v174 = vld [vmem:[%s154 + $0x2c] sm:$0xf]
        %v175 = vld [vmem:[%s154 + $0x30] sm:$0xf]
        %v176 = vld [vmem:[%s154 + $0x34] sm:$0xf]
        %v177 = vld [vmem:[%s154 + $0x38] sm:$0xf]
        %v178 = vld [vmem:[%s154 + $0x3c] sm:$0xf]
        %v179 = vld [vmem:[#allocation2] sm:$0xf]
        %v180 = vld [vmem:[#allocation2 + $0x4] sm:$0xf]
        %v181 = vld [vmem:[#allocation2 + $0x8] sm:$0xf]
        %v182 = vld [vmem:[#allocation2 + $0xc] sm:$0xf]
        %v183 = vld [vmem:[#allocation2 + $0x10] sm:$0xf]
        %v184 = vld [vmem:[#allocation2 + $0x14] sm:$0xf]
        %v185 = vld [vmem:[#allocation2 + $0x18] sm:$0xf]
        %v186 = vld [vmem:[#allocation2 + $0x1c] sm:$0xf]
        %v187 = vld [vmem:[#allocation2 + $0x20] sm:$0xf]
        %v188 = vld [vmem:[#allocation2 + $0x24] sm:$0xf]
        %v189 = vld [vmem:[#allocation2 + $0x28] sm:$0xf]
        %v190 = vld [vmem:[#allocation2 + $0x2c] sm:$0xf]
        %v191 = vld [vmem:[#allocation2 + $0x30] sm:$0xf]
        %v192 = vld [vmem:[#allocation2 + $0x34] sm:$0xf]
        %v193 = vld [vmem:[#allocation2 + $0x38] sm:$0xf]
        %v194 = vld [vmem:[#allocation2 + $0x3c] sm:$0xf]
        %v211 = vunpack.c.l.b16 %v163
        %v212 = vunpack.c.l.b16 %v164
        %v213 = vunpack.c.l.b16 %v165
        %v214 = vunpack.c.l.b16 %v166
        %v215 = vunpack.c.l.b16 %v167
        %v216 = vunpack.c.l.b16 %v168
        %v217 = vunpack.c.l.b16 %v169
        %v218 = vunpack.c.l.b16 %v170
        %v219 = vunpack.c.l.b16 %v171
        %v220 = vunpack.c.l.b16 %v172
        %v221 = vunpack.c.l.b16 %v173
        %v222 = vunpack.c.l.b16 %v174
        %v223 = vunpack.c.l.b16 %v175
        %v224 = vunpack.c.l.b16 %v176
        %v225 = vunpack.c.l.b16 %v177
        %v226 = vunpack.c.l.b16 %v178
        %v227 = vpack.c.b16 %v212, %v211
        %v228 = vpack.c.b16 %v214, %v213
        %v229 = vpack.c.b16 %v216, %v215
        %v230 = vpack.c.b16 %v218, %v217
        %v231 = vpack.c.b16 %v220, %v219
        %v232 = vpack.c.b16 %v222, %v221
        %v233 = vpack.c.b16 %v224, %v223
        %v234 = vpack.c.b16 %v226, %v225
        %v259 = vunpack.c.l.b16 %v179
        %v260 = vunpack.c.l.b16 %v180
        %v261 = vunpack.c.l.b16 %v181
        %v262 = vunpack.c.l.b16 %v182
        %v263 = vunpack.c.l.b16 %v183
        %v264 = vunpack.c.l.b16 %v184
        %v265 = vunpack.c.l.b16 %v185
        %v266 = vunpack.c.l.b16 %v186
        %v267 = vunpack.c.l.b16 %v187
        %v268 = vunpack.c.l.b16 %v188
        %v269 = vunpack.c.l.b16 %v189
        %v270 = vunpack.c.l.b16 %v190
        %v271 = vunpack.c.l.b16 %v191
        %v272 = vunpack.c.l.b16 %v192
        %v273 = vunpack.c.l.b16 %v193
        %v274 = vunpack.c.l.b16 %v194
        %v275 = vpack.c.b16 %v260, %v259
        %v276 = vpack.c.b16 %v262, %v261
        %v277 = vpack.c.b16 %v264, %v263
        %v278 = vpack.c.b16 %v266, %v265
        %v279 = vpack.c.b16 %v268, %v267
        %v280 = vpack.c.b16 %v270, %v269
        %v281 = vpack.c.b16 %v272, %v271
        %v282 = vpack.c.b16 %v274, %v273
        %291 = vmatprep.subr.bf16.mxu0 0
        %292 = vmatpush1.bf16.msra.mxu0 %v275
        %293 = vmatprep.subr.bf16.mxu0 0
        %294 = vmatpush1.bf16.msra.mxu0 %v276
        %295 = vmatprep.subr.bf16.mxu0 0
        %296 = vmatpush1.bf16.msra.mxu0 %v277
        %297 = vmatprep.subr.bf16.mxu0 0
        %298 = vmatpush1.bf16.msra.mxu0 %v278
        %299 = vmatprep.subr.bf16.mxu0 0
        %300 = vmatpush1.bf16.msra.mxu0 %v279
        %301 = vmatprep.subr.bf16.mxu0 0
        %302 = vmatpush1.bf16.msra.mxu0 %v280
        %303 = vmatprep.subr.bf16.mxu0 0
        %304 = vmatpush1.bf16.msra.mxu0 %v281
        %305 = vmatprep.subr.bf16.mxu0 0
        %306 = vmatpush1.bf16.msra.mxu0 %v282
        %307 = vmatprep.subr.bf16.mxu0 0
        %308 = vmatpush1.bf16.msra.mxu0 0
        %309 = vmatprep.subr.bf16.mxu0 0
        %310 = vmatpush1.bf16.msra.mxu0 0
        %311 = vmatprep.subr.bf16.mxu0 0
        %312 = vmatpush1.bf16.msra.mxu0 0
        %313 = vmatprep.subr.bf16.mxu0 0
        %314 = vmatpush1.bf16.msra.mxu0 0
        %315 = vmatprep.subr.bf16.mxu0 0
        %316 = vmatpush1.bf16.msra.mxu0 0
        %317 = vmatprep.subr.bf16.mxu0 0
        %318 = vmatpush1.bf16.msra.mxu0 0
        %319 = vmatprep.subr.bf16.mxu0 0
        %320 = vmatpush1.bf16.msra.mxu0 0
        %321 = vmatprep.subr.bf16.mxu0 0
        %322 = vmatpush1.bf16.msra.mxu0 0
        %323 = vmatprep.mubr.bf16.mxu0 0
        %324 = vmatmul.mubr.bf16.gmra.mrb[0].mxu0 %v227
        %v325 = vpop.f32.mrb[0].mxu0
        %v326 = vadd.f32 0.0, %v325
        %v327 = vpop.f32.mrb[0].mxu0
        %v328 = vpop.f32.mrb[0].mxu0
        %v329 = vadd.f32 0.0, %v328
        %v330 = vpop.f32.mrb[0].mxu0
        %331 = vmatprep.mubr.bf16.mxu0 0
        %332 = vmatmul.mubr.bf16.gmra.mrb[0].mxu0 %v228
        %v333 = vpop.f32.mrb[0].mxu0
        %v334 = vadd.f32 0.0, %v333
        %v335 = vpop.f32.mrb[0].mxu0
        %v336 = vpop.f32.mrb[0].mxu0
        %v337 = vadd.f32 0.0, %v336
        %v338 = vpop.f32.mrb[0].mxu0
        %339 = vmatprep.mubr.bf16.mxu0 0
        %340 = vmatmul.mubr.bf16.gmra.mrb[0].mxu0 %v229
        %v341 = vpop.f32.mrb[0].mxu0
        %v342 = vadd.f32 0.0, %v341
        %v343 = vpop.f32.mrb[0].mxu0
        %v344 = vpop.f32.mrb[0].mxu0
        %v345 = vadd.f32 0.0, %v344
        %v346 = vpop.f32.mrb[0].mxu0
        %347 = vmatprep.mubr.bf16.mxu0 0
        %348 = vmatmul.mubr.bf16.gmra.mrb[0].mxu0 %v230
        %v349 = vpop.f32.mrb[0].mxu0
        %v350 = vadd.f32 0.0, %v349
        %v351 = vpop.f32.mrb[0].mxu0
        %v352 = vpop.f32.mrb[0].mxu0
        %v353 = vadd.f32 0.0, %v352
        %v354 = vpop.f32.mrb[0].mxu0
        %355 = vmatprep.mubr.bf16.mxu0 0
        %356 = vmatmul.mubr.bf16.gmra.mrb[0].mxu0 %v231
        %v357 = vpop.f32.mrb[0].mxu0
        %v358 = vadd.f32 0.0, %v357
        %v359 = vpop.f32.mrb[0].mxu0
        %v360 = vpop.f32.mrb[0].mxu0
        %v361 = vadd.f32 0.0, %v360
        %v362 = vpop.f32.mrb[0].mxu0
        %363 = vmatprep.mubr.bf16.mxu0 0
        %364 = vmatmul.mubr.bf16.gmra.mrb[0].mxu0 %v232
        %v365 = vpop.f32.mrb[0].mxu0
        %v366 = vadd.f32 0.0, %v365
        %v367 = vpop.f32.mrb[0].mxu0
        %v368 = vpop.f32.mrb[0].mxu0
        %v369 = vadd.f32 0.0, %v368
        %v370 = vpop.f32.mrb[0].mxu0
        %371 = vmatprep.mubr.bf16.mxu0 0
        %372 = vmatmul.mubr.bf16.gmra.mrb[0].mxu0 %v233
        %v373 = vpop.f32.mrb[0].mxu0
        %v374 = vadd.f32 0.0, %v373
        %v375 = vpop.f32.mrb[0].mxu0
        %v376 = vpop.f32.mrb[0].mxu0
        %v377 = vadd.f32 0.0, %v376
        %v378 = vpop.f32.mrb[0].mxu0
        %379 = vmatprep.mubr.bf16.mxu0 0
        %380 = vmatmul.mubr.bf16.gmra.mrb[0].mxu0 %v234
        %v381 = vpop.f32.mrb[0].mxu0
        %v382 = vadd.f32 0.0, %v381
        %v383 = vpop.f32.mrb[0].mxu0
        %v384 = vpop.f32.mrb[0].mxu0
        %v385 = vadd.f32 0.0, %v384
        %v386 = vpop.f32.mrb[0].mxu0
        %387 = vdwg.mxu0
        %v388 = vlaneseq
        %v389 = vand.u32 %v388, 127
        %vm390 = vcmp.lt.s32.totalorder %v389, 8
        %v391 = vsel %vm390, %v326, -1e+30
        %v392 = vsel %vm390, %v329, -1e+30
        %v393 = vsel %vm390, %v334, -1e+30
        %v394 = vsel %vm390, %v337, -1e+30
        %v395 = vsel %vm390, %v342, -1e+30
        %v396 = vsel %vm390, %v345, -1e+30
        %v397 = vsel %vm390, %v350, -1e+30
        %v398 = vsel %vm390, %v353, -1e+30
        %v399 = vsel %vm390, %v358, -1e+30
        %v400 = vsel %vm390, %v361, -1e+30
        %v401 = vsel %vm390, %v366, -1e+30
        %v402 = vsel %vm390, %v369, -1e+30
        %v403 = vsel %vm390, %v374, -1e+30
        %v404 = vsel %vm390, %v377, -1e+30
        %v405 = vsel %vm390, %v382, -1e+30
        %v406 = vsel %vm390, %v385, -1e+30
        %407 = vmax.xlane.f32.xlu0 %v391
        %v408 = vpop.xlane.xlu0 %407
        %409 = vmax.xlane.f32.xlu0 %v392
        %v410 = vpop.xlane.xlu0 %409
        %411 = vmax.xlane.f32.xlu0 %v393
        %v412 = vpop.xlane.xlu0 %411
        %413 = vmax.xlane.f32.xlu0 %v394
        %v414 = vpop.xlane.xlu0 %413
        %415 = vmax.xlane.f32.xlu0 %v395
        %v416 = vpop.xlane.xlu0 %415
        %417 = vmax.xlane.f32.xlu0 %v396
        %v418 = vpop.xlane.xlu0 %417
        %419 = vmax.xlane.f32.xlu0 %v397
        %v420 = vpop.xlane.xlu0 %419
        %421 = vmax.xlane.f32.xlu0 %v398
        %v422 = vpop.xlane.xlu0 %421
        %423 = vmax.xlane.f32.xlu0 %v399
        %v424 = vpop.xlane.xlu0 %423
        %425 = vmax.xlane.f32.xlu0 %v400
        %v426 = vpop.xlane.xlu0 %425
        %427 = vmax.xlane.f32.xlu0 %v401
        %v428 = vpop.xlane.xlu0 %427
        %429 = vmax.xlane.f32.xlu0 %v402
        %v430 = vpop.xlane.xlu0 %429
        %431 = vmax.xlane.f32.xlu0 %v403
        %v432 = vpop.xlane.xlu0 %431
        %433 = vmax.xlane.f32.xlu0 %v404
        %v434 = vpop.xlane.xlu0 %433
        %435 = vmax.xlane.f32.xlu0 %v405
        %v436 = vpop.xlane.xlu0 %435
        %437 = vmax.xlane.f32.xlu0 %v406
        %v438 = vpop.xlane.xlu0 %437
        %v439 = vsub.f32 %v391, %v408
        %v440 = vsub.f32 %v392, %v410
        %v441 = vsub.f32 %v393, %v412
        %v442 = vsub.f32 %v394, %v414
        %v443 = vsub.f32 %v395, %v416
        %v444 = vsub.f32 %v396, %v418
        %v445 = vsub.f32 %v397, %v420
        %v446 = vsub.f32 %v398, %v422
        %v447 = vsub.f32 %v399, %v424
        %v448 = vsub.f32 %v400, %v426
        %v449 = vsub.f32 %v401, %v428
        %v450 = vsub.f32 %v402, %v430
        %v451 = vsub.f32 %v403, %v432
        %v452 = vsub.f32 %v404, %v434
        %v453 = vsub.f32 %v405, %v436
        %v454 = vsub.f32 %v406, %v438
        %v455 = vmul.f32 %v439, 1.442695
        %v456 = vpow.pop %v455
        %v457 = vmul.f32 %v440, 1.442695
        %v458 = vpow.pop %v457
        %v459 = vmul.f32 %v441, 1.442695
        %v460 = vpow.pop %v459
        %v461 = vmul.f32 %v442, 1.442695
        %v462 = vpow.pop %v461
        %v463 = vmul.f32 %v443, 1.442695
        %v464 = vpow.pop %v463
        %v465 = vmul.f32 %v444, 1.442695
        %v466 = vpow.pop %v465
        %v467 = vmul.f32 %v445, 1.442695
        %v468 = vpow.pop %v467
        %v469 = vmul.f32 %v446, 1.442695
        %v470 = vpow.pop %v469
        %v471 = vmul.f32 %v447, 1.442695
        %v472 = vpow.pop %v471
        %v473 = vmul.f32 %v448, 1.442695
        %v474 = vpow.pop %v473
        %v475 = vmul.f32 %v449, 1.442695
        %v476 = vpow.pop %v475
        %v477 = vmul.f32 %v450, 1.442695
        %v478 = vpow.pop %v477
        %v479 = vmul.f32 %v451, 1.442695
        %v480 = vpow.pop %v479
        %v481 = vmul.f32 %v452, 1.442695
        %v482 = vpow.pop %v481
        %v483 = vmul.f32 %v453, 1.442695
        %v484 = vpow.pop %v483
        %v485 = vmul.f32 %v454, 1.442695
        %v486 = vpow.pop %v485
        %487 = vadd.xlane.f32.xlu0 %v456
        %v488 = vpop.xlane.xlu0 %487
        %489 = vadd.xlane.f32.xlu0 %v458
        %v490 = vpop.xlane.xlu0 %489
        %491 = vadd.xlane.f32.xlu0 %v460
        %v492 = vpop.xlane.xlu0 %491
        %493 = vadd.xlane.f32.xlu0 %v462
        %v494 = vpop.xlane.xlu0 %493
        %495 = vadd.xlane.f32.xlu0 %v464
        %v496 = vpop.xlane.xlu0 %495
        %497 = vadd.xlane.f32.xlu0 %v466
        %v498 = vpop.xlane.xlu0 %497
        %499 = vadd.xlane.f32.xlu0 %v468
        %v500 = vpop.xlane.xlu0 %499
        %501 = vadd.xlane.f32.xlu0 %v470
        %v502 = vpop.xlane.xlu0 %501
        %503 = vadd.xlane.f32.xlu0 %v472
        %v504 = vpop.xlane.xlu0 %503
        %505 = vadd.xlane.f32.xlu0 %v474
        %v506 = vpop.xlane.xlu0 %505
        %507 = vadd.xlane.f32.xlu0 %v476
        %v508 = vpop.xlane.xlu0 %507
        %509 = vadd.xlane.f32.xlu0 %v478
        %v510 = vpop.xlane.xlu0 %509
        %511 = vadd.xlane.f32.xlu0 %v480
        %v512 = vpop.xlane.xlu0 %511
        %513 = vadd.xlane.f32.xlu0 %v482
        %v514 = vpop.xlane.xlu0 %513
        %515 = vadd.xlane.f32.xlu0 %v484
        %v516 = vpop.xlane.xlu0 %515
        %517 = vadd.xlane.f32.xlu0 %v486
        %v518 = vpop.xlane.xlu0 %517
        %v519 = vrcp.pop %v488
        %v520 = vrcp.pop %v490
        %v521 = vrcp.pop %v492
        %v522 = vrcp.pop %v494
        %v523 = vrcp.pop %v496
        %v524 = vrcp.pop %v498
        %v525 = vrcp.pop %v500
        %v526 = vrcp.pop %v502
        %v527 = vrcp.pop %v504
        %v528 = vrcp.pop %v506
        %v529 = vrcp.pop %v508
        %v530 = vrcp.pop %v510
        %v531 = vrcp.pop %v512
        %v532 = vrcp.pop %v514
        %v533 = vrcp.pop %v516
        %v534 = vrcp.pop %v518
        %v535 = vmul.f32 %v456, %v519
        %v536 = vmul.f32 %v458, %v520
        %v537 = vmul.f32 %v460, %v521
        %v538 = vmul.f32 %v462, %v522
        %v539 = vmul.f32 %v464, %v523
        %v540 = vmul.f32 %v466, %v524
        %v541 = vmul.f32 %v468, %v525
        %v542 = vmul.f32 %v470, %v526
        %v543 = vmul.f32 %v472, %v527
        %v544 = vmul.f32 %v474, %v528
        %v545 = vmul.f32 %v476, %v529
        %v546 = vmul.f32 %v478, %v530
        %v547 = vmul.f32 %v480, %v531
        %v548 = vmul.f32 %v482, %v532
        %v549 = vmul.f32 %v484, %v533
        %v550 = vmul.f32 %v486, %v534
        %551 = vst [vmem:[%s160] sm:$0xff] %v535
        %552 = vst [vmem:[%s160 + $0x8] sm:$0xff] %v536
        %553 = vst [vmem:[%s160 + $0x10] sm:$0xff] %v537
        %554 = vst [vmem:[%s160 + $0x18] sm:$0xff] %v538
        %555 = vst [vmem:[%s160 + $0x20] sm:$0xff] %v539
        %556 = vst [vmem:[%s160 + $0x28] sm:$0xff] %v540
        %557 = vst [vmem:[%s160 + $0x30] sm:$0xff] %v541
        %558 = vst [vmem:[%s160 + $0x38] sm:$0xff] %v542
        %559 = vst [vmem:[%s160 + $0x40] sm:$0xff] %v543
        %560 = vst [vmem:[%s160 + $0x48] sm:$0xff] %v544
        %561 = vst [vmem:[%s160 + $0x50] sm:$0xff] %v545
        %562 = vst [vmem:[%s160 + $0x58] sm:$0xff] %v546
        %563 = vst [vmem:[%s160 + $0x60] sm:$0xff] %v547
        %564 = vst [vmem:[%s160 + $0x68] sm:$0xff] %v548
        %565 = vst [vmem:[%s160 + $0x70] sm:$0xff] %v549
        %566 = vst [vmem:[%s160 + $0x78] sm:$0xff] %v550
        %s567 = smul.u32 16, %s14
        %p568 = scmp.lt.s32.totalorder %s567, 31
        %s569 = scalar_select %p568, %s567, 31
        %s570 = smul.addr %s569, 8
        %s571 = scalar_lea.vmem %s2, %s570
        // Predicated region
        $region33: #{mixtral_moe.2} parent=27 // pred_check
          %p572 = pneg %p79
        $region34: #{mixtral_moe.2} parent=27 // pred_check_branch
          %574 = sbr.rel (%p572) target = $region36
        $region35: #{mixtral_moe.2} parent=27 // pred_region
          %s575 = smul.u32 16, %s14
        $region36: #{mixtral_moe.2} parent=27 // pred_fallthru
          _
      $region28: #{mixtral_moe.2} parent=5 // pred_fallthru
        _
      %p576 = scmp.le.s32.totalorder 2, %s9
      // Predicated region
      $region37: #{mixtral_moe.2} parent=5 // pred_check
        %p577 = pneg %p576
      $region38: #{mixtral_moe.2} parent=5 // pred_check_branch
        %579 = sbr.rel (%p577) target = $region40
      $region39: #{mixtral_moe.2} parent=5 // pred_region
        %s580 = ssub.s32 %s9, 2
        // Predicated region
        $region41: #{mixtral_moe.2} parent=39 // pred_check
          %p581 = pneg %p85
        $region42: #{mixtral_moe.2} parent=39 // pred_check_branch
          %583 = sbr.rel (%p581) target = $region44
        $region43: #{mixtral_moe.2} parent=39 // pred_region
          %s584 = smul.u32 16, %s15
          %p585 = scmp.lt.s32.totalorder %s584, 31
          %s586 = scalar_select %p585, %s584, 31
          %s587 = smul.addr %s586, 8
          %s588 = scalar_lea.vmem %s2, %s587
        $region44: #{mixtral_moe.2} parent=39 // pred_fallthru
          _
      $region40: #{mixtral_moe.2} parent=5 // pred_fallthru
        _
    $region6: #{mixtral_moe.2} parent=1 // loop_footer
      %s13 = sadd.s32 1, %s9
    $region7: #{mixtral_moe.2} parent=1 // loop_footer_branch
      %8 = sbr.rel target = $region3
    $region8: #{mixtral_moe.2} parent=1 // loop_exit
      _
    %589 = vsyncpa [#allocation3], 1
    %s590 = scalar_lea.sflag [#allocation3], 1
    %591 = vsyncpa %s590, 1

// kernel: mixtral_moe.3
$region0: #{mixtral_moe.3}
  #allocation0 [shape = 'u32[]', space=smem, size = 0x4, offset = 0x4, fixed_abs, tag = 'smem constant byte address 0x4 - core index']
  #allocation1 [shape = 'u32[144,128]{1,0:T(1,128)}', space=vmem, size = 0x12000, scoped, tag = 'internal scratch']
  #allocation2 [shape = 'f32[128,128]{1,0:T(8,128)}', space=vmem, size = 0x10000, scoped, tag = 'scratch operand']
  #allocation3 [shape = 's32[1]{0}', space=sflag, size = 0x4, scoped, tag = 'scoped memory for mixtral_moe.3']
  #allocation4 [shape = 'u8[1024]{0}', space=smem, size = 0x400, scoped, tag = 'prefetched SMEM operand 0']
  %s0 = inlined_call_operand.vmem [shape: s32[2,8], index: 0, kind: input, shape index: {}]
  %s1 = inlined_call_operand.vmem [shape: bf16[256,128], index: 1, kind: input, shape index: {}]
  %s2 = inlined_call_operand.hbm [shape: bf16[8,2,128,512], index: 2, kind: input, shape index: {}]
  %s3 = inlined_call_operand.vmem [shape: bf16[8,512,128], index: 3, kind: input, shape index: {}]
  %s4 = inlined_call_operand.vmem [shape: f32[8,256,1], index: 4, kind: input, shape index: {}]
  %s5 = inlined_call_operand.hbm [shape: f32[256,128], index: 5, kind: output, shape index: {}]
  %s6 = sld [smem:[#allocation0]]
  $region65: #{mixtral_moe.3} parent=0
    _
  %s8 = ssub.s32 1, %s6
  %s9 = scalar_select 0, %s8, %s6
  %s10 = sshll.u32 %s0, 4
  %s11 = int_to_ptr.vmem [resolvable:$true] %s10
  %13 = dma.vmem_to_smem %s11, 32, [#allocation4], [#allocation3]
  %14 = dma.done [#allocation3], 32
  %15 = sfence
  $region1: #{mixtral_moe.3} parent=0
    #allocation5 [shape = 'u8[262144]{0}', space=vmem, size = 0x40000, scoped, tag = 'input window, operand 2']
    #allocation6 [shape = 's32[2]{0}', space=sflag, size = 0x8, scoped, tag = 'scoped memory for mixtral_moe.3']
    #allocation7 [shape = 's32[2]{0}', space=sflag, size = 0x8, scoped, tag = 'scoped memory for mixtral_moe.3']
    #allocation8 [shape = 'u8[131072]{0}', space=vmem, size = 0x20000, scoped, tag = 'output window, operand 0']
    %16 = vsyncpa [#allocation6], 0
    %s17 = scalar_lea.sflag [#allocation6], 1
    %18 = vsyncpa %s17, 0
    %19 = vsyncpa [#allocation7], 0
    %s20 = scalar_lea.sflag [#allocation7], 1
    %21 = vsyncpa %s20, 0
    loop: start=0, step=1, limit=34
    $region2: #{mixtral_moe.3} parent=1 // loop_pre_header
      _
    $region3: #{mixtral_moe.3} parent=1 // loop_header
      %s23 = sphi 0, %s27
      %p24 = scmp.ge.s32.totalorder %s23, 34
      %s30 = sphi 0, %s49
      %s31 = sphi 0, %s45
      %s32 = sphi 0, %s41
      %s33 = sphi 0, %s30
      %s34 = sphi 0, %s31
      %s35 = sphi 0, %s32
      %s36 = sphi 0, %s33
      %s37 = sphi 0, %s34
      %s38 = sphi 0, %s35
      %s52 = sphi 0, %s54
      %s55 = sphi 0, %s52
      %s56 = sphi 0, %s55
      %s72 = sphi 0, %s56
      %s80 = sphi 0, %s82
      %s83 = sphi 0, %s80
      %s84 = sphi 0, %s83
      %s100 = sphi 0, %s84
      %s108 = sphi 0, %s110
      %s111 = sphi 0, %s108
      %s112 = sphi 0, %s111
      %s128 = sphi 0, %s112
      %s136 = sphi 0, %s138
      %s139 = sphi 0, %s136
      %s140 = sphi 0, %s139
      %s156 = sphi 0, %s140
      %s162 = sphi 0, %s164
      %s165 = sphi 0, %s162
      %s166 = sphi 0, %s165
      %s182 = sphi 0, %s166
    $region4: #{mixtral_moe.3} parent=1 // loop_header_branch
      %26 = sbr.rel (%p24) target = $region8
    $region5: #{mixtral_moe.3} parent=1 // loop_body
      %s28 = ssub.s32 %s23, 1
      %s29 = ssub.s32 %s23, 2
      %s39 = sadd.s32 1, %s32
      %p40 = scmp.ge.s32.totalorder %s39, 2
      %s41 = scalar_select %p40, 0, %s39
      %s42 = sadd.s32 1, %s31
      %s43 = scalar_select %p40, %s42, %s31
      %p44 = scmp.ge.s32.totalorder %s43, 8
      %s45 = scalar_select %p44, 0, %s43
      %s46 = sadd.s32 1, %s30
      %s47 = scalar_select %p44, %s46, %s30
      %p48 = scmp.ge.s32.totalorder %s47, 2
      %s49 = scalar_select %p48, 0, %s47
      %s50 = ssub.s32 %s30, %s49
      %p51 = scmp.eq.s32.totalorder %s50, 0
      %s53 = sadd.s32 %s52, 1
      %s54 = scalar_select %p51, %s52, %s53
      %p57 = pneg %p51
      %p58 = scmp.eq.s32.totalorder %s23, 31
      %p59 = por %p57, %p58
      %p60 = scmp.ne.s32.totalorder %s52, %s55
      %p61 = scmp.eq.s32.totalorder %s23, 0
      %p62 = por %p60, %p61
      %p63 = scmp.ne.s32.totalorder %s52, %s55
      %p64 = scmp.eq.s32.totalorder %s28, 31
      %p65 = por %p63, %p64
      %p66 = scmp.ne.s32.totalorder %s55, %s56
      %p67 = scmp.eq.s32.totalorder %s28, 0
      %p68 = por %p66, %p67
      %p69 = scmp.ne.s32.totalorder %s55, %s56
      %p70 = scmp.eq.s32.totalorder %s29, 31
      %p71 = por %p69, %p70
      %p73 = scmp.ne.s32.totalorder %s56, %s72
      %p74 = scmp.eq.s32.totalorder %s29, 0
      %p75 = por %p73, %p74
      %s76 = ssub.s32 %s31, %s45
      %s77 = ssub.s32 %s32, %s41
      %s78 = sor.u32 %s76, %s77
      %p79 = scmp.eq.s32.totalorder %s78, 0
      %s81 = sadd.s32 %s80, 1
      %s82 = scalar_select %p79, %s80, %s81
      %p85 = pneg %p79
      %p86 = scmp.eq.s32.totalorder %s23, 31
      %p87 = por %p85, %p86
      %p88 = scmp.ne.s32.totalorder %s80, %s83
      %p89 = scmp.eq.s32.totalorder %s23, 0
      %p90 = por %p88, %p89
      %p91 = scmp.ne.s32.totalorder %s80, %s83
      %p92 = scmp.eq.s32.totalorder %s28, 31
      %p93 = por %p91, %p92
      %p94 = scmp.ne.s32.totalorder %s83, %s84
      %p95 = scmp.eq.s32.totalorder %s28, 0
      %p96 = por %p94, %p95
      %p97 = scmp.ne.s32.totalorder %s83, %s84
      %p98 = scmp.eq.s32.totalorder %s29, 31
      %p99 = por %p97, %p98
      %p101 = scmp.ne.s32.totalorder %s84, %s100
      %p102 = scmp.eq.s32.totalorder %s29, 0
      %p103 = por %p101, %p102
      %s104 = ssub.s32 %s31, %s45
      %s105 = ssub.s32 %s32, %s41
      %s106 = sor.u32 %s104, %s105
      %p107 = scmp.eq.s32.totalorder %s106, 0
      %s109 = sadd.s32 %s108, 1
      %s110 = scalar_select %p107, %s108, %s109
      %p113 = pneg %p107
      %p114 = scmp.eq.s32.totalorder %s23, 31
      %p115 = por %p113, %p114
      %p116 = scmp.ne.s32.totalorder %s108, %s111
      %p117 = scmp.eq.s32.totalorder %s23, 0
      %p118 = por %p116, %p117
      %p119 = scmp.ne.s32.totalorder %s108, %s111
      %p120 = scmp.eq.s32.totalorder %s28, 31
      %p121 = por %p119, %p120
      %p122 = scmp.ne.s32.totalorder %s111, %s112
      %p123 = scmp.eq.s32.totalorder %s28, 0
      %p124 = por %p122, %p123
      %p125 = scmp.ne.s32.totalorder %s111, %s112
      %p126 = scmp.eq.s32.totalorder %s29, 31
      %p127 = por %p125, %p126
      %p129 = scmp.ne.s32.totalorder %s112, %s128
      %p130 = scmp.eq.s32.totalorder %s29, 0
      %p131 = por %p129, %p130
      %s132 = ssub.s32 %s31, %s45
      %s133 = ssub.s32 %s30, %s49
      %s134 = sor.u32 %s132, %s133
      %p135 = scmp.eq.s32.totalorder %s134, 0
      %s137 = sadd.s32 %s136, 1
      %s138 = scalar_select %p135, %s136, %s137
      %p141 = pneg %p135
      %p142 = scmp.eq.s32.totalorder %s23, 31
      %p143 = por %p141, %p142
      %p144 = scmp.ne.s32.totalorder %s136, %s139
      %p145 = scmp.eq.s32.totalorder %s23, 0
      %p146 = por %p144, %p145
      %p147 = scmp.ne.s32.totalorder %s136, %s139
      %p148 = scmp.eq.s32.totalorder %s28, 31
      %p149 = por %p147, %p148
      %p150 = scmp.ne.s32.totalorder %s139, %s140
      %p151 = scmp.eq.s32.totalorder %s28, 0
      %p152 = por %p150, %p151
      %p153 = scmp.ne.s32.totalorder %s139, %s140
      %p154 = scmp.eq.s32.totalorder %s29, 31
      %p155 = por %p153, %p154
      %p157 = scmp.ne.s32.totalorder %s140, %s156
      %p158 = scmp.eq.s32.totalorder %s29, 0
      %p159 = por %p157, %p158
      %s160 = ssub.s32 %s30, %s49
      %p161 = scmp.eq.s32.totalorder %s160, 0
      %s163 = sadd.s32 %s162, 1
      %s164 = scalar_select %p161, %s162, %s163
      %p167 = pneg %p161
      %p168 = scmp.eq.s32.totalorder %s23, 31
      %p169 = por %p167, %p168
      %p170 = scmp.ne.s32.totalorder %s162, %s165
      %p171 = scmp.eq.s32.totalorder %s23, 0
      %p172 = por %p170, %p171
      %p173 = scmp.ne.s32.totalorder %s162, %s165
      %p174 = scmp.eq.s32.totalorder %s28, 31
      %p175 = por %p173, %p174
      %p176 = scmp.ne.s32.totalorder %s165, %s166
      %p177 = scmp.eq.s32.totalorder %s28, 0
      %p178 = por %p176, %p177
      %p179 = scmp.ne.s32.totalorder %s165, %s166
      %p180 = scmp.eq.s32.totalorder %s29, 31
      %p181 = por %p179, %p180
      %p183 = scmp.ne.s32.totalorder %s166, %s182
      %p184 = scmp.eq.s32.totalorder %s29, 0
      %p185 = por %p183, %p184
      %p186 = scmp.le.s32.totalorder 1, %s23
      %p187 = scmp.lt.s32.totalorder %s23, 33
      %p188 = pnand %p186, %p187
      %p189 = pneg %p188
      // Predicated region
      $region9: #{mixtral_moe.3} parent=5 // pred_check
        _
      $region10: #{mixtral_moe.3} parent=5 // pred_check_branch
        %191 = sbr.rel (%p188) target = $region12
      $region11: #{mixtral_moe.3} parent=5 // pred_region
        %s192 = ssub.s32 %s23, 1
      $region12: #{mixtral_moe.3} parent=5 // pred_fallthru
        _
      %p193 = scmp.lt.s32.totalorder %s23, 32
      // Predicated region
      $region13: #{mixtral_moe.3} parent=5 // pred_check
        %p194 = pneg %p193
      $region14: #{mixtral_moe.3} parent=5 // pred_check_branch
        %196 = sbr.rel (%p194) target = $region16
      $region15: #{mixtral_moe.3} parent=5 // pred_region
        // Predicated region
        $region17: #{mixtral_moe.3} parent=15 // pred_check
          %p197 = pneg %p62
        $region18: #{mixtral_moe.3} parent=15 // pred_check_branch
          %199 = sbr.rel (%p197) target = $region20
        $region19: #{mixtral_moe.3} parent=15 // pred_region
          %s200 = smul.u32 16, %s30
          %p201 = scmp.lt.s32.totalorder %s200, 31
          %s202 = scalar_select %p201, %s200, 31
          %s203 = smul.addr %s202, 4
          %s204 = scalar_lea.vmem %s1, %s203
          %s205 = smul.u32 16, %s30
        $region20: #{mixtral_moe.3} parent=15 // pred_fallthru
          _
        // Predicated region
        $region21: #{mixtral_moe.3} parent=15 // pred_check
          %p206 = pneg %p90
        $region22: #{mixtral_moe.3} parent=15 // pred_check_branch
          %208 = sbr.rel (%p206) target = $region24
        $region23: #{mixtral_moe.3} parent=15 // pred_region
          %s209 = sand.u32 %s80, 1
          %s210 = scalar_lea.sflag [#allocation6], %s209
          %s211 = sand.u32 %s80, 1
          %s212 = smul.addr %s211, 256
          %s213 = scalar_lea.vmem [#allocation5], %s212
          %s215 = ssub.s32 4096, 4096
          %216 = vsyncadd %s210, %s215
          %s217 = smul.addr %s32, 64
          %s218 = smul.addr %s31, 128
          %s219 = sadd.s32 %s217, %s218
          %s220 = smul.addr %s219, 64
          %s221 = scalar_lea.hbm %s2, %s220
          %s222 = sshll.u32 %s213, 4
          %s223 = int_to_ptr.vmem [resolvable:$true] %s222
          %228 = dma.hbm_to_vmem [thread:$0]  %s221, 4096, %s223, %s210, 256, 256, 16
        $region24: #{mixtral_moe.3} parent=15 // pred_fallthru
          _
        // Predicated region
        $region25: #{mixtral_moe.3} parent=15 // pred_check
          %p229 = pneg %p118
        $region26: #{mixtral_moe.3} parent=15 // pred_check_branch
          %231 = sbr.rel (%p229) target = $region28
        $region27: #{mixtral_moe.3} parent=15 // pred_region
          %s232 = smul.u32 32, %s32
          %p233 = scmp.lt.s32.totalorder %s31, 7
          %s234 = scalar_select %p233, %s31, 7
          %p235 = scmp.lt.s32.totalorder %s232, 63
          %s236 = scalar_select %p235, %s232, 63
          %s237 = smul.addr %s234, 64
          %s238 = sadd.s32 %s236, %s237
          %s239 = smul.addr %s238, 4
          %s240 = scalar_lea.vmem %s3, %s239
          %s241 = smul.u32 32, %s32
        $region28: #{mixtral_moe.3} parent=15 // pred_fallthru
          _
        // Predicated region
        $region29: #{mixtral_moe.3} parent=15 // pred_check
          %p242 = pneg %p146
        $region30: #{mixtral_moe.3} parent=15 // pred_check_branch
          %244 = sbr.rel (%p242) target = $region32
        $region31: #{mixtral_moe.3} parent=15 // pred_region
          %s245 = smul.u32 16, %s30
          %p246 = scmp.lt.s32.totalorder %s31, 7
          %s247 = scalar_select %p246, %s31, 7
          %p248 = scmp.lt.s32.totalorder %s245, 31
          %s249 = scalar_select %p248, %s245, 31
          %s250 = smul.addr %s247, 32
          %s251 = sadd.s32 %s249, %s250
          %s252 = smul.addr %s251, 8
          %s253 = scalar_lea.vmem %s4, %s252
          %s254 = smul.u32 16, %s30
        $region32: #{mixtral_moe.3} parent=15 // pred_fallthru
          _
      $region16: #{mixtral_moe.3} parent=5 // pred_fallthru
        _
      %p255 = scmp.le.s32.totalorder 1, %s23
      %p256 = scmp.lt.s32.totalorder %s23, 33
      %p257 = pnand %p255, %p256
      %p258 = pneg %p257
      // Predicated region
      $region33: #{mixtral_moe.3} parent=5 // pred_check
        _
      $region34: #{mixtral_moe.3} parent=5 // pred_check_branch
        %260 = sbr.rel (%p257) target = $region36
      $region35: #{mixtral_moe.3} parent=5 // pred_region
        %s261 = ssub.s32 %s23, 1
        %s262 = sand.u32 %s83, 1
        %s263 = scalar_lea.sflag [#allocation6], %s262
        %s264 = sand.u32 %s83, 1
        %s265 = smul.addr %s264, 256
        %s266 = scalar_lea.vmem [#allocation5], %s265
        // Predicated region
        $region37: #{mixtral_moe.3} parent=35 // pred_check
          %p267 = pneg %p96
        $region38: #{mixtral_moe.3} parent=35 // pred_check_branch
          %269 = sbr.rel (%p267) target = $region40
        $region39: #{mixtral_moe.3} parent=35 // pred_region
          %270 = dma.done %s263, 4096
        $region40: #{mixtral_moe.3} parent=35 // pred_fallthru
          _
        %s271 = smul.u32 16, %s33
        %p272 = scmp.lt.s32.totalorder %s271, 31
        %s273 = scalar_select %p272, %s271, 31
        %s274 = smul.addr %s273, 4
        %s275 = scalar_lea.vmem %s1, %s274
        %p276 = pneg %p68
        %p277 = pneg %p65
        %s278 = sand.u32 %s83, 1
        %s279 = scalar_lea.sflag [#allocation6], %s278
        %s280 = sand.u32 %s83, 1
        %s281 = smul.addr %s280, 256
        %s282 = scalar_lea.vmem [#allocation5], %s281
        %p283 = pneg %p96
        %p284 = pneg %p93
        %s285 = smul.u32 32, %s35
        %p286 = scmp.lt.s32.totalorder %s34, 7
        %s287 = scalar_select %p286, %s34, 7
        %p288 = scmp.lt.s32.totalorder %s285, 63
        %s289 = scalar_select %p288, %s285, 63
        %s290 = smul.addr %s287, 64
        %s291 = sadd.s32 %s289, %s290
        %s292 = smul.addr %s291, 4
        %s293 = scalar_lea.vmem %s3, %s292
        %p294 = pneg %p124
        %p295 = pneg %p121
        %s296 = smul.u32 16, %s33
        %p297 = scmp.lt.s32.totalorder %s34, 7
        %s298 = scalar_select %p297, %s34, 7
        %p299 = scmp.lt.s32.totalorder %s296, 31
        %s300 = scalar_select %p299, %s296, 31
        %s301 = smul.addr %s298, 32
        %s302 = sadd.s32 %s300, %s301
        %s303 = smul.addr %s302, 8
        %s304 = scalar_lea.vmem %s4, %s303
        %p305 = pneg %p152
        %p306 = pneg %p149
        %p307 = pneg %p178
        %p308 = pneg %p175
        %s309 = sand.u32 %s165, 1
        %s310 = scalar_lea.sflag [#allocation7], %s309
        %s311 = sand.u32 %s165, 1
        %s312 = smul.addr %s311, 128
        %s313 = scalar_lea.vmem [#allocation8], %s312
        %s314 = smul.u32 16, %s33
        %p315 = scmp.lt.s32.totalorder %s314, 31
        %s316 = scalar_select %p315, %s314, 31
        %s317 = smul.addr %s316, 4
        %s318 = scalar_lea.vmem %s1, %s317
        %s319 = smul.u32 16, %s33
        %s320 = smul.u32 32, %s35
        %p321 = scmp.lt.s32.totalorder %s34, 7
        %s322 = scalar_select %p321, %s34, 7
        %p323 = scmp.lt.s32.totalorder %s320, 63
        %s324 = scalar_select %p323, %s320, 63
        %s325 = smul.addr %s322, 64
        %s326 = sadd.s32 %s324, %s325
        %s327 = smul.addr %s326, 4
        %s328 = scalar_lea.vmem %s3, %s327
        %s329 = smul.u32 32, %s35
        %s330 = smul.u32 16, %s33
        %p331 = scmp.lt.s32.totalorder %s34, 7
        %s332 = scalar_select %p331, %s34, 7
        %p333 = scmp.lt.s32.totalorder %s330, 31
        %s334 = scalar_select %p333, %s330, 31
        %s335 = smul.addr %s332, 32
        %s336 = sadd.s32 %s334, %s335
        %s337 = smul.addr %s336, 8
        %s338 = scalar_lea.vmem %s4, %s337
        %s339 = smul.u32 16, %s33
        %s340 = smul.u32 16, %s33
        %p342 = scmp.eq.s32.totalorder %s34, 0
        %p343 = scmp.eq.s32.totalorder %s35, 0
        %p344 = pnand %p342, %p343
        %p345 = pneg %p344
        // Predicated region
        $region41: #{mixtral_moe.3} parent=35 // pred_check
          _
        $region42: #{mixtral_moe.3} parent=35 // pred_check_branch
          %347 = sbr.rel (%p344) target = $region44
        $region43: #{mixtral_moe.3} parent=35 // pred_region
          %348 = vst [vmem:[#allocation2] sm:$0xff] 0.0
          %349 = vst [vmem:[#allocation2 + $0x8] sm:$0xff] 0.0
          %350 = vst [vmem:[#allocation2 + $0x10] sm:$0xff] 0.0
          %351 = vst [vmem:[#allocation2 + $0x18] sm:$0xff] 0.0
          %352 = vst [vmem:[#allocation2 + $0x20] sm:$0xff] 0.0
          %353 = vst [vmem:[#allocation2 + $0x28] sm:$0xff] 0.0
          %354 = vst [vmem:[#allocation2 + $0x30] sm:$0xff] 0.0
          %355 = vst [vmem:[#allocation2 + $0x38] sm:$0xff] 0.0
          %356 = vst [vmem:[#allocation2 + $0x40] sm:$0xff] 0.0
          %357 = vst [vmem:[#allocation2 + $0x48] sm:$0xff] 0.0
          %358 = vst [vmem:[#allocation2 + $0x50] sm:$0xff] 0.0
          %359 = vst [vmem:[#allocation2 + $0x58] sm:$0xff] 0.0
          %360 = vst [vmem:[#allocation2 + $0x60] sm:$0xff] 0.0
          %361 = vst [vmem:[#allocation2 + $0x68] sm:$0xff] 0.0
          %362 = vst [vmem:[#allocation2 + $0x70] sm:$0xff] 0.0
          %363 = vst [vmem:[#allocation2 + $0x78] sm:$0xff] 0.0
        $region44: #{mixtral_moe.3} parent=35 // pred_fallthru
          _
        %s364 = sshra.s32 %s34, 7
        %s365 = sand.u32 %s34, 127
        %s366 = sadd.s32 %s364, %s33
        %s367 = smul.u32 %s366, 128
        %s368 = sshra.s32 %s34, 7
        %s369 = sand.u32 %s34, 127
        %s370 = sadd.s32 %s367, %s369
        %s371 = sld [smem:[#allocation4 + %s370]]
        %p372 = scmp.ne.s32.totalorder %s371, 0
        // Predicated region
        $region45: #{mixtral_moe.3} parent=35 // pred_check
          %p373 = pneg %p372
        $region46: #{mixtral_moe.3} parent=35 // pred_check_branch
          %375 = sbr.rel (%p373) target = $region48
        $region47: #{mixtral_moe.3} parent=35 // pred_region
          %v376 = vld [vmem:[%s318] sm:$0xf]
          %v377 = vld [vmem:[%s318 + $0x4] sm:$0xf]
          %v378 = vld [vmem:[%s318 + $0x8] sm:$0xf]
          %v379 = vld [vmem:[%s318 + $0xc] sm:$0xf]
          %v380 = vld [vmem:[%s318 + $0x10] sm:$0xf]
          %v381 = vld [vmem:[%s318 + $0x14] sm:$0xf]
          %v382 = vld [vmem:[%s318 + $0x18] sm:$0xf]
          %v383 = vld [vmem:[%s318 + $0x1c] sm:$0xf]
          %v384 = vld [vmem:[%s318 + $0x20] sm:$0xf]
          %v385 = vld [vmem:[%s318 + $0x24] sm:$0xf]
          %v386 = vld [vmem:[%s318 + $0x28] sm:$0xf]
          %v387 = vld [vmem:[%s318 + $0x2c] sm:$0xf]
          %v388 = vld [vmem:[%s318 + $0x30] sm:$0xf]
          %v389 = vld [vmem:[%s318 + $0x34] sm:$0xf]
          %v390 = vld [vmem:[%s318 + $0x38] sm:$0xf]
          %v391 = vld [vmem:[%s318 + $0x3c] sm:$0xf]
          %v392 = vld [vmem:[%s266] sm:$0xff]
          %v393 = vld [vmem:[%s266 + $0x8] sm:$0xff]
          %v394 = vld [vmem:[%s266 + $0x10] sm:$0xff]
          %v395 = vld [vmem:[%s266 + $0x18] sm:$0xff]
          %v396 = vld [vmem:[%s266 + $0x20] sm:$0xff]
          %v397 = vld [vmem:[%s266 + $0x28] sm:$0xff]
          %v398 = vld [vmem:[%s266 + $0x30] sm:$0xff]
          %v399 = vld [vmem:[%s266 + $0x38] sm:$0xff]
          %v400 = vld [vmem:[%s266 + $0x40] sm:$0xff]
          %v401 = vld [vmem:[%s266 + $0x48] sm:$0xff]
          %v402 = vld [vmem:[%s266 + $0x50] sm:$0xff]
          %v403 = vld [vmem:[%s266 + $0x58] sm:$0xff]
          %v404 = vld [vmem:[%s266 + $0x60] sm:$0xff]
          %v405 = vld [vmem:[%s266 + $0x68] sm:$0xff]
          %v406 = vld [vmem:[%s266 + $0x70] sm:$0xff]
          %v407 = vld [vmem:[%s266 + $0x78] sm:$0xff]
          %v408 = vld [vmem:[%s266 + $0x80] sm:$0xff]
          %v409 = vld [vmem:[%s266 + $0x88] sm:$0xff]
          %v410 = vld [vmem:[%s266 + $0x90] sm:$0xff]
          %v411 = vld [vmem:[%s266 + $0x98] sm:$0xff]
          %v412 = vld [vmem:[%s266 + $0xa0] sm:$0xff]
          %v413 = vld [vmem:[%s266 + $0xa8] sm:$0xff]
          %v414 = vld [vmem:[%s266 + $0xb0] sm:$0xff]
          %v415 = vld [vmem:[%s266 + $0xb8] sm:$0xff]
          %v416 = vld [vmem:[%s266 + $0xc0] sm:$0xff]
          %v417 = vld [vmem:[%s266 + $0xc8] sm:$0xff]
          %v418 = vld [vmem:[%s266 + $0xd0] sm:$0xff]
          %v419 = vld [vmem:[%s266 + $0xd8] sm:$0xff]
          %v420 = vld [vmem:[%s266 + $0xe0] sm:$0xff]
          %v421 = vld [vmem:[%s266 + $0xe8] sm:$0xff]
          %v422 = vld [vmem:[%s266 + $0xf0] sm:$0xff]
          %v423 = vld [vmem:[%s266 + $0xf8] sm:$0xff]
          %v440 = vunpack.c.l.b16 %v376
          %v441 = vunpack.c.l.b16 %v377
          %v442 = vunpack.c.l.b16 %v378
          %v443 = vunpack.c.l.b16 %v379
          %v444 = vunpack.c.l.b16 %v380
          %v445 = vunpack.c.l.b16 %v381
          %v446 = vunpack.c.l.b16 %v382
          %v447 = vunpack.c.l.b16 %v383
          %v448 = vunpack.c.l.b16 %v384
          %v449 = vunpack.c.l.b16 %v385
          %v450 = vunpack.c.l.b16 %v386
          %v451 = vunpack.c.l.b16 %v387
          %v452 = vunpack.c.l.b16 %v388
          %v453 = vunpack.c.l.b16 %v389
          %v454 = vunpack.c.l.b16 %v390
          %v455 = vunpack.c.l.b16 %v391
          %v456 = vpack.c.b16 %v441, %v440
          %v457 = vpack.c.b16 %v443, %v442
          %v458 = vpack.c.b16 %v445, %v444
          %v459 = vpack.c.b16 %v447, %v446
          %v460 = vpack.c.b16 %v449, %v448
          %v461 = vpack.c.b16 %v451, %v450
          %v462 = vpack.c.b16 %v453, %v452
          %v463 = vpack.c.b16 %v455, %v454
          %v504 = vunpack.c.l.b16 %v392
          %v505 = vunpack.c.h.b16 %v392
          %v506 = vunpack.c.l.b16 %v393
          %v507 = vunpack.c.h.b16 %v393
          %v508 = vunpack.c.l.b16 %v394
          %v509 = vunpack.c.h.b16 %v394
          %v510 = vunpack.c.l.b16 %v395
          %v511 = vunpack.c.h.b16 %v395
          %v512 = vunpack.c.l.b16 %v396
          %v513 = vunpack.c.h.b16 %v396
          %v514 = vunpack.c.l.b16 %v397
          %v515 = vunpack.c.h.b16 %v397
          %v516 = vunpack.c.l.b16 %v398
          %v517 = vunpack.c.h.b16 %v398
          %v518 = vunpack.c.l.b16 %v399
          %v519 = vunpack.c.h.b16 %v399
          %v520 = vunpack.c.l.b16 %v400
          %v521 = vunpack.c.h.b16 %v400
          %v522 = vunpack.c.l.b16 %v401
          %v523 = vunpack.c.h.b16 %v401
          %v524 = vunpack.c.l.b16 %v402
          %v525 = vunpack.c.h.b16 %v402
          %v526 = vunpack.c.l.b16 %v403
          %v527 = vunpack.c.h.b16 %v403
          %v528 = vunpack.c.l.b16 %v404
          %v529 = vunpack.c.h.b16 %v404
          %v530 = vunpack.c.l.b16 %v405
          %v531 = vunpack.c.h.b16 %v405
          %v532 = vunpack.c.l.b16 %v406
          %v533 = vunpack.c.h.b16 %v406
          %v534 = vunpack.c.l.b16 %v407
          %v535 = vunpack.c.h.b16 %v407
          %v536 = vunpack.c.l.b16 %v408
          %v537 = vunpack.c.h.b16 %v408
          %v538 = vunpack.c.l.b16 %v409
          %v539 = vunpack.c.h.b16 %v409
          %v540 = vunpack.c.l.b16 %v410
          %v541 = vunpack.c.h.b16 %v410
          %v542 = vunpack.c.l.b16 %v411
          %v543 = vunpack.c.h.b16 %v411
          %v544 = vunpack.c.l.b16 %v412
          %v545 = vunpack.c.h.b16 %v412
          %v546 = vunpack.c.l.b16 %v413
          %v547 = vunpack.c.h.b16 %v413
          %v548 = vunpack.c.l.b16 %v414
          %v549 = vunpack.c.h.b16 %v414
          %v550 = vunpack.c.l.b16 %v415
          %v551 = vunpack.c.h.b16 %v415
          %v552 = vunpack.c.l.b16 %v416
          %v553 = vunpack.c.h.b16 %v416
          %v554 = vunpack.c.l.b16 %v417
          %v555 = vunpack.c.h.b16 %v417
          %v556 = vunpack.c.l.b16 %v418
          %v557 = vunpack.c.h.b16 %v418
          %v558 = vunpack.c.l.b16 %v419
          %v559 = vunpack.c.h.b16 %v419
          %v560 = vunpack.c.l.b16 %v420
          %v561 = vunpack.c.h.b16 %v420
          %v562 = vunpack.c.l.b16 %v421
          %v563 = vunpack.c.h.b16 %v421
          %v564 = vunpack.c.l.b16 %v422
          %v565 = vunpack.c.h.b16 %v422
          %v566 = vunpack.c.l.b16 %v423
          %v567 = vunpack.c.h.b16 %v423
          %v568 = vpack.c.b16 %v508, %v504
          %v569 = vpack.c.b16 %v509, %v505
          %v570 = vpack.c.b16 %v510, %v506
          %v571 = vpack.c.b16 %v511, %v507
          %v572 = vpack.c.b16 %v516, %v512
          %v573 = vpack.c.b16 %v517, %v513
          %v574 = vpack.c.b16 %v518, %v514
          %v575 = vpack.c.b16 %v519, %v515
          %v576 = vpack.c.b16 %v524, %v520
          %v577 = vpack.c.b16 %v525, %v521
          %v578 = vpack.c.b16 %v526, %v522
          %v579 = vpack.c.b16 %v527, %v523
          %v580 = vpack.c.b16 %v532, %v528
          %v581 = vpack.c.b16 %v533, %v529
          %v582 = vpack.c.b16 %v534, %v530
          %v583 = vpack.c.b16 %v535, %v531
          %v584 = vpack.c.b16 %v540, %v536
          %v585 = vpack.c.b16 %v541, %v537
          %v586 = vpack.c.b16 %v542, %v538
          %v587 = vpack.c.b16 %v543, %v539
          %v588 = vpack.c.b16 %v548, %v544
          %v589 = vpack.c.b16 %v549, %v545
          %v590 = vpack.c.b16 %v550, %v546
          %v591 = vpack.c.b16 %v551, %v547
          %v592 = vpack.c.b16 %v556, %v552
          %v593 = vpack.c.b16 %v557, %v553
          %v594 = vpack.c.b16 %v558, %v554
          %v595 = vpack.c.b16 %v559, %v555
          %v596 = vpack.c.b16 %v564, %v560
          %v597 = vpack.c.b16 %v565, %v561
          %v598 = vpack.c.b16 %v566, %v562
          %v599 = vpack.c.b16 %v567, %v563
          %632 = vmatprep.subr.bf16.mxu0 %v569
          %633 = vmatpush1.bf16.msra.mxu0 %v568
          %634 = vmatprep.subr.bf16.mxu0 %v573
          %635 = vmatpush1.bf16.msra.mxu0 %v572
          %636 = vmatprep.subr.bf16.mxu0 %v577
          %637 = vmatpush1.bf16.msra.mxu0 %v576
          %638 = vmatprep.subr.bf16.mxu0 %v581
          %639 = vmatpush1.bf16.msra.mxu0 %v580
          %640 = vmatprep.subr.bf16.mxu0 %v585
          %641 = vmatpush1.bf16.msra.mxu0 %v584
          %642 = vmatprep.subr.bf16.mxu0 %v589
          %643 = vmatpush1.bf16.msra.mxu0 %v588
          %644 = vmatprep.subr.bf16.mxu0 %v593
          %645 = vmatpush1.bf16.msra.mxu0 %v592
          %646 = vmatprep.subr.bf16.mxu0 %v597
          %647 = vmatpush1.bf16.msra.mxu0 %v596
          %648 = vmatprep.subr.bf16.mxu0 0
          %649 = vmatpush1.bf16.msra.mxu0 0
          %650 = vmatprep.subr.bf16.mxu0 0
          %651 = vmatpush1.bf16.msra.mxu0 0
          %652 = vmatprep.subr.bf16.mxu0 0
          %653 = vmatpush1.bf16.msra.mxu0 0
          %654 = vmatprep.subr.bf16.mxu0 0
          %655 = vmatpush1.bf16.msra.mxu0 0
          %656 = vmatprep.subr.bf16.mxu0 0
          %657 = vmatpush1.bf16.msra.mxu0 0
          %658 = vmatprep.subr.bf16.mxu0 0
          %659 = vmatpush1.bf16.msra.mxu0 0
          %660 = vmatprep.subr.bf16.mxu0 0
          %661 = vmatpush1.bf16.msra.mxu0 0
          %662 = vmatprep.subr.bf16.mxu0 0
          %663 = vmatpush1.bf16.msra.mxu0 0
          %664 = vmatprep.mubr.bf16.mxu0 0
          %665 = vmatmul.mubr.bf16.gmra.mrb[0].mxu0 %v456
          %v666 = vpop.f32.mrb[0].mxu0
          %v667 = vadd.f32 0.0, %v666
          %v668 = vpop.f32.mrb[0].mxu0
          %v669 = vadd.f32 0.0, %v668
          %v670 = vpop.f32.mrb[0].mxu0
          %v671 = vadd.f32 0.0, %v670
          %v672 = vpop.f32.mrb[0].mxu0
          %v673 = vadd.f32 0.0, %v672
          %674 = vmatprep.mubr.bf16.mxu0 0
          %675 = vmatmul.mubr.bf16.gmra.mrb[0].mxu0 %v457
          %v676 = vpop.f32.mrb[0].mxu0
          %v677 = vadd.f32 0.0, %v676
          %v678 = vpop.f32.mrb[0].mxu0
          %v679 = vadd.f32 0.0, %v678
          %v680 = vpop.f32.mrb[0].mxu0
          %v681 = vadd.f32 0.0, %v680
          %v682 = vpop.f32.mrb[0].mxu0
          %v683 = vadd.f32 0.0, %v682
          %684 = vmatprep.mubr.bf16.mxu0 0
          %685 = vmatmul.mubr.bf16.gmra.mrb[0].mxu0 %v458
          %v686 = vpop.f32.mrb[0].mxu0
          %v687 = vadd.f32 0.0, %v686
          %v688 = vpop.f32.mrb[0].mxu0
          %v689 = vadd.f32 0.0, %v688
          %v690 = vpop.f32.mrb[0].mxu0
          %v691 = vadd.f32 0.0, %v690
          %v692 = vpop.f32.mrb[0].mxu0
          %v693 = vadd.f32 0.0, %v692
          %694 = vmatprep.mubr.bf16.mxu0 0
          %695 = vmatmul.mubr.bf16.gmra.mrb[0].mxu0 %v459
          %v696 = vpop.f32.mrb[0].mxu0
          %v697 = vadd.f32 0.0, %v696
          %v698 = vpop.f32.mrb[0].mxu0
          %v699 = vadd.f32 0.0, %v698
          %v700 = vpop.f32.mrb[0].mxu0
          %v701 = vadd.f32 0.0, %v700
          %v702 = vpop.f32.mrb[0].mxu0
          %v703 = vadd.f32 0.0, %v702
          %704 = vmatprep.mubr.bf16.mxu0 0
          %705 = vmatmul.mubr.bf16.gmra.mrb[0].mxu0 %v460
          %v706 = vpop.f32.mrb[0].mxu0
          %v707 = vadd.f32 0.0, %v706
          %v708 = vpop.f32.mrb[0].mxu0
          %v709 = vadd.f32 0.0, %v708
          %v710 = vpop.f32.mrb[0].mxu0
          %v711 = vadd.f32 0.0, %v710
          %v712 = vpop.f32.mrb[0].mxu0
          %v713 = vadd.f32 0.0, %v712
          %714 = vmatprep.mubr.bf16.mxu0 0
          %715 = vmatmul.mubr.bf16.gmra.mrb[0].mxu0 %v461
          %v716 = vpop.f32.mrb[0].mxu0
          %v717 = vadd.f32 0.0, %v716
          %v718 = vpop.f32.mrb[0].mxu0
          %v719 = vadd.f32 0.0, %v718
          %v720 = vpop.f32.mrb[0].mxu0
          %v721 = vadd.f32 0.0, %v720
          %v722 = vpop.f32.mrb[0].mxu0
          %v723 = vadd.f32 0.0, %v722
          %724 = vmatprep.mubr.bf16.mxu0 0
          %725 = vmatmul.mubr.bf16.gmra.mrb[0].mxu0 %v462
          %v726 = vpop.f32.mrb[0].mxu0
          %v727 = vadd.f32 0.0, %v726
          %v728 = vpop.f32.mrb[0].mxu0
          %v729 = vadd.f32 0.0, %v728
          %v730 = vpop.f32.mrb[0].mxu0
          %v731 = vadd.f32 0.0, %v730
          %v732 = vpop.f32.mrb[0].mxu0
          %v733 = vadd.f32 0.0, %v732
          %734 = vmatprep.mubr.bf16.mxu0 0
          %735 = vmatmul.mubr.bf16.gmra.mrb[0].mxu0 %v463
          %v736 = vpop.f32.mrb[0].mxu0
          %v737 = vadd.f32 0.0, %v736
          %v738 = vpop.f32.mrb[0].mxu0
          %v739 = vadd.f32 0.0, %v738
          %v740 = vpop.f32.mrb[0].mxu0
          %v741 = vadd.f32 0.0, %v740
          %v742 = vpop.f32.mrb[0].mxu0
          %v743 = vadd.f32 0.0, %v742
          %744 = vdwg.mxu0
          %745 = vmatprep.subr.bf16.mxu0 %v571
          %746 = vmatpush1.bf16.msra.mxu0 %v570
          %747 = vmatprep.subr.bf16.mxu0 %v575
          %748 = vmatpush1.bf16.msra.mxu0 %v574
          %749 = vmatprep.subr.bf16.mxu0 %v579
          %750 = vmatpush1.bf16.msra.mxu0 %v578
          %751 = vmatprep.subr.bf16.mxu0 %v583
          %752 = vmatpush1.bf16.msra.mxu0 %v582
          %753 = vmatprep.subr.bf16.mxu0 %v587
          %754 = vmatpush1.bf16.msra.mxu0 %v586
          %755 = vmatprep.subr.bf16.mxu0 %v591
          %756 = vmatpush1.bf16.msra.mxu0 %v590
          %757 = vmatprep.subr.bf16.mxu0 %v595
          %758 = vmatpush1.bf16.msra.mxu0 %v594
          %759 = vmatprep.subr.bf16.mxu0 %v599
          %760 = vmatpush1.bf16.msra.mxu0 %v598
          %761 = vmatprep.subr.bf16.mxu0 0
          %762 = vmatpush1.bf16.msra.mxu0 0
          %763 = vmatprep.subr.bf16.mxu0 0
          %764 = vmatpush1.bf16.msra.mxu0 0
          %765 = vmatprep.subr.bf16.mxu0 0
          %766 = vmatpush1.bf16.msra.mxu0 0
          %767 = vmatprep.subr.bf16.mxu0 0
          %768 = vmatpush1.bf16.msra.mxu0 0
          %769 = vmatprep.subr.bf16.mxu0 0
          %770 = vmatpush1.bf16.msra.mxu0 0
          %771 = vmatprep.subr.bf16.mxu0 0
          %772 = vmatpush1.bf16.msra.mxu0 0
          %773 = vmatprep.subr.bf16.mxu0 0
          %774 = vmatpush1.bf16.msra.mxu0 0
          %775 = vmatprep.subr.bf16.mxu0 0
          %776 = vmatpush1.bf16.msra.mxu0 0
          %777 = vmatprep.mubr.bf16.mxu0 0
          %778 = vmatmul.mubr.bf16.gmra.mrb[0].mxu0 %v456
          %v779 = vpop.f32.mrb[0].mxu0
          %v780 = vadd.f32 0.0, %v779
          %v781 = vpop.f32.mrb[0].mxu0
          %v782 = vadd.f32 0.0, %v781
          %v783 = vpop.f32.mrb[0].mxu0
          %v784 = vadd.f32 0.0, %v783
          %v785 = vpop.f32.mrb[0].mxu0
          %v786 = vadd.f32 0.0, %v785
          %787 = vmatprep.mubr.bf16.mxu0 0
          %788 = vmatmul.mubr.bf16.gmra.mrb[0].mxu0 %v457
          %v789 = vpop.f32.mrb[0].mxu0
          %v790 = vadd.f32 0.0, %v789
          %v791 = vpop.f32.mrb[0].mxu0
          %v792 = vadd.f32 0.0, %v791
          %v793 = vpop.f32.mrb[0].mxu0
          %v794 = vadd.f32 0.0, %v793
          %v795 = vpop.f32.mrb[0].mxu0
          %v796 = vadd.f32 0.0, %v795
          %797 = vmatprep.mubr.bf16.mxu0 0
          %798 = vmatmul.mubr.bf16.gmra.mrb[0].mxu0 %v458
          %v799 = vpop.f32.mrb[0].mxu0
          %v800 = vadd.f32 0.0, %v799
          %v801 = vpop.f32.mrb[0].mxu0
          %v802 = vadd.f32 0.0, %v801
          %v803 = vpop.f32.mrb[0].mxu0
          %v804 = vadd.f32 0.0, %v803
          %v805 = vpop.f32.mrb[0].mxu0
          %v806 = vadd.f32 0.0, %v805
          %807 = vmatprep.mubr.bf16.mxu0 0
          %808 = vmatmul.mubr.bf16.gmra.mrb[0].mxu0 %v459
          %v809 = vpop.f32.mrb[0].mxu0
          %v810 = vadd.f32 0.0, %v809
          %v811 = vpop.f32.mrb[0].mxu0
          %v812 = vadd.f32 0.0, %v811
          %v813 = vpop.f32.mrb[0].mxu0
          %v814 = vadd.f32 0.0, %v813
          %v815 = vpop.f32.mrb[0].mxu0
          %v816 = vadd.f32 0.0, %v815
          %817 = vmatprep.mubr.bf16.mxu0 0
          %818 = vmatmul.mubr.bf16.gmra.mrb[0].mxu0 %v460
          %v819 = vpop.f32.mrb[0].mxu0
          %v820 = vadd.f32 0.0, %v819
          %v821 = vpop.f32.mrb[0].mxu0
          %v822 = vadd.f32 0.0, %v821
          %v823 = vpop.f32.mrb[0].mxu0
          %v824 = vadd.f32 0.0, %v823
          %v825 = vpop.f32.mrb[0].mxu0
          %v826 = vadd.f32 0.0, %v825
          %827 = vmatprep.mubr.bf16.mxu0 0
          %828 = vmatmul.mubr.bf16.gmra.mrb[0].mxu0 %v461
          %v829 = vpop.f32.mrb[0].mxu0
          %v830 = vadd.f32 0.0, %v829
          %v831 = vpop.f32.mrb[0].mxu0
          %v832 = vadd.f32 0.0, %v831
          %v833 = vpop.f32.mrb[0].mxu0
          %v834 = vadd.f32 0.0, %v833
          %v835 = vpop.f32.mrb[0].mxu0
          %v836 = vadd.f32 0.0, %v835
          %837 = vmatprep.mubr.bf16.mxu0 0
          %838 = vmatmul.mubr.bf16.gmra.mrb[0].mxu0 %v462
          %v839 = vpop.f32.mrb[0].mxu0
          %v840 = vadd.f32 0.0, %v839
          %v841 = vpop.f32.mrb[0].mxu0
          %v842 = vadd.f32 0.0, %v841
          %v843 = vpop.f32.mrb[0].mxu0
          %v844 = vadd.f32 0.0, %v843
          %v845 = vpop.f32.mrb[0].mxu0
          %v846 = vadd.f32 0.0, %v845
          %847 = vmatprep.mubr.bf16.mxu0 0
          %848 = vmatmul.mubr.bf16.gmra.mrb[0].mxu0 %v463
          %v849 = vpop.f32.mrb[0].mxu0
          %v850 = vadd.f32 0.0, %v849
          %v851 = vpop.f32.mrb[0].mxu0
          %v852 = vadd.f32 0.0, %v851
          %v853 = vpop.f32.mrb[0].mxu0
          %v854 = vadd.f32 0.0, %v853
          %v855 = vpop.f32.mrb[0].mxu0
          %v856 = vadd.f32 0.0, %v855
          %857 = vdwg.mxu0
          %v858 = vxor.u32 %v667, 2147483648
          %v859 = vxor.u32 %v669, 2147483648
          %v860 = vxor.u32 %v671, 2147483648
          %v861 = vxor.u32 %v673, 2147483648
          %v862 = vxor.u32 %v677, 2147483648
          %v863 = vxor.u32 %v679, 2147483648
          %v864 = vxor.u32 %v681, 2147483648
          %v865 = vxor.u32 %v683, 2147483648
          %v866 = vxor.u32 %v687, 2147483648
          %v867 = vxor.u32 %v689, 2147483648
          %v868 = vxor.u32 %v691, 2147483648
          %v869 = vxor.u32 %v693, 2147483648
          %v870 = vxor.u32 %v697, 2147483648
          %v871 = vxor.u32 %v699, 2147483648
          %v872 = vxor.u32 %v701, 2147483648
          %v873 = vxor.u32 %v703, 2147483648
          %v874 = vxor.u32 %v707, 2147483648
          %v875 = vxor.u32 %v709, 2147483648
          %v876 = vxor.u32 %v711, 2147483648
          %v877 = vxor.u32 %v713, 2147483648
          %v878 = vxor.u32 %v717, 2147483648
          %v879 = vxor.u32 %v719, 2147483648
          %v880 = vxor.u32 %v721, 2147483648
          %v881 = vxor.u32 %v723, 2147483648
          %v882 = vxor.u32 %v727, 2147483648
          %v883 = vxor.u32 %v729, 2147483648
          %v884 = vxor.u32 %v731, 2147483648
          %v885 = vxor.u32 %v733, 2147483648
          %v886 = vxor.u32 %v737, 2147483648
          %v887 = vxor.u32 %v739, 2147483648
          %v888 = vxor.u32 %v741, 2147483648
          %v889 = vxor.u32 %v743, 2147483648
          %v890 = vmul.f32 %v858, 1.442695
          %v891 = vpow.pop %v890
          %v892 = vmul.f32 %v859, 1.442695
          %v893 = vpow.pop %v892
          %v894 = vmul.f32 %v860, 1.442695
          %v895 = vpow.pop %v894
          %v896 = vmul.f32 %v861, 1.442695
          %v897 = vpow.pop %v896
          %v898 = vmul.f32 %v862, 1.442695
          %v899 = vpow.pop %v898
          %v900 = vmul.f32 %v863, 1.442695
          %v901 = vpow.pop %v900
          %v902 = vmul.f32 %v864, 1.442695
          %v903 = vpow.pop %v902
          %v904 = vmul.f32 %v865, 1.442695
          %v905 = vpow.pop %v904
          %v906 = vmul.f32 %v866, 1.442695
          %v907 = vpow.pop %v906
          %v908 = vmul.f32 %v867, 1.442695
          %v909 = vpow.pop %v908
          %v910 = vmul.f32 %v868, 1.442695
          %v911 = vpow.pop %v910
          %v912 = vmul.f32 %v869, 1.442695
          %v913 = vpow.pop %v912
          %v914 = vmul.f32 %v870, 1.442695
          %v915 = vpow.pop %v914
          %v916 = vmul.f32 %v871, 1.442695
          %v917 = vpow.pop %v916
          %v918 = vmul.f32 %v872, 1.442695
          %v919 = vpow.pop %v918
          %v920 = vmul.f32 %v873, 1.442695
          %v921 = vpow.pop %v920
          %v922 = vmul.f32 %v874, 1.442695
          %v923 = vpow.pop %v922
          %v924 = vmul.f32 %v875, 1.442695
          %v925 = vpow.pop %v924
          %v926 = vmul.f32 %v876, 1.442695
          %v927 = vpow.pop %v926
          %v928 = vmul.f32 %v877, 1.442695
          %v929 = vpow.pop %v928
          %v930 = vmul.f32 %v878, 1.442695
          %v931 = vpow.pop %v930
          %v932 = vmul.f32 %v879, 1.442695
          %v933 = vpow.pop %v932
          %v934 = vmul.f32 %v880, 1.442695
          %v935 = vpow.pop %v934
          %v936 = vmul.f32 %v881, 1.442695
          %v937 = vpow.pop %v936
          %v938 = vmul.f32 %v882, 1.442695
          %v939 = vpow.pop %v938
          %v940 = vmul.f32 %v883, 1.442695
          %v941 = vpow.pop %v940
          %v942 = vmul.f32 %v884, 1.442695
          %v943 = vpow.pop %v942
          %v944 = vmul.f32 %v885, 1.442695
          %v945 = vpow.pop %v944
          %v946 = vmul.f32 %v886, 1.442695
          %v947 = vpow.pop %v946
          %v948 = vmul.f32 %v887, 1.442695
          %v949 = vpow.pop %v948
          %v950 = vmul.f32 %v888, 1.442695
          %v951 = vpow.pop %v950
          %v952 = vmul.f32 %v889, 1.442695
          %v953 = vpow.pop %v952
          %v954 = vadd.f32 %v891, 1.0
          %v955 = vadd.f32 %v893, 1.0
          %v956 = vadd.f32 %v895, 1.0
          %v957 = vadd.f32 %v897, 1.0
          %v958 = vadd.f32 %v899, 1.0
          %v959 = vadd.f32 %v901, 1.0
          %v960 = vadd.f32 %v903, 1.0
          %v961 = vadd.f32 %v905, 1.0
          %v962 = vadd.f32 %v907, 1.0
          %v963 = vadd.f32 %v909, 1.0
          %v964 = vadd.f32 %v911, 1.0
          %v965 = vadd.f32 %v913, 1.0
          %v966 = vadd.f32 %v915, 1.0
          %v967 = vadd.f32 %v917, 1.0
          %v968 = vadd.f32 %v919, 1.0
          %v969 = vadd.f32 %v921, 1.0
          %v970 = vadd.f32 %v923, 1.0
          %v971 = vadd.f32 %v925, 1.0
          %v972 = vadd.f32 %v927, 1.0
          %v973 = vadd.f32 %v929, 1.0
          %v974 = vadd.f32 %v931, 1.0
          %v975 = vadd.f32 %v933, 1.0
          %v976 = vadd.f32 %v935, 1.0
          %v977 = vadd.f32 %v937, 1.0
          %v978 = vadd.f32 %v939, 1.0
          %v979 = vadd.f32 %v941, 1.0
          %v980 = vadd.f32 %v943, 1.0
          %v981 = vadd.f32 %v945, 1.0
          %v982 = vadd.f32 %v947, 1.0
          %v983 = vadd.f32 %v949, 1.0
          %v984 = vadd.f32 %v951, 1.0
          %v985 = vadd.f32 %v953, 1.0
          %v986 = vrcp.pop %v954
          %v987 = vmul.f32 1.0, %v986
          %v988 = vrcp.pop %v955
          %v989 = vmul.f32 1.0, %v988
          %v990 = vrcp.pop %v956
          %v991 = vmul.f32 1.0, %v990
          %v992 = vrcp.pop %v957
          %v993 = vmul.f32 1.0, %v992
          %v994 = vrcp.pop %v958
          %v995 = vmul.f32 1.0, %v994
          %v996 = vrcp.pop %v959
          %v997 = vmul.f32 1.0, %v996
          %v998 = vrcp.pop %v960
          %v999 = vmul.f32 1.0, %v998
          %v1000 = vrcp.pop %v961
          %v1001 = vmul.f32 1.0, %v1000
          %v1002 = vrcp.pop %v962
          %v1003 = vmul.f32 1.0, %v1002
          %v1004 = vrcp.pop %v963
          %v1005 = vmul.f32 1.0, %v1004
          %v1006 = vrcp.pop %v964
          %v1007 = vmul.f32 1.0, %v1006
          %v1008 = vrcp.pop %v965
          %v1009 = vmul.f32 1.0, %v1008
          %v1010 = vrcp.pop %v966
          %v1011 = vmul.f32 1.0, %v1010
          %v1012 = vrcp.pop %v967
          %v1013 = vmul.f32 1.0, %v1012
          %v1014 = vrcp.pop %v968
          %v1015 = vmul.f32 1.0, %v1014
          %v1016 = vrcp.pop %v969
          %v1017 = vmul.f32 1.0, %v1016
          %v1018 = vrcp.pop %v970
          %v1019 = vmul.f32 1.0, %v1018
          %v1020 = vrcp.pop %v971
          %v1021 = vmul.f32 1.0, %v1020
          %v1022 = vrcp.pop %v972
          %v1023 = vmul.f32 1.0, %v1022
          %v1024 = vrcp.pop %v973
          %v1025 = vmul.f32 1.0, %v1024
          %v1026 = vrcp.pop %v974
          %v1027 = vmul.f32 1.0, %v1026
          %v1028 = vrcp.pop %v975
          %v1029 = vmul.f32 1.0, %v1028
          %v1030 = vrcp.pop %v976
          %v1031 = vmul.f32 1.0, %v1030
          %v1032 = vrcp.pop %v977
          %v1033 = vmul.f32 1.0, %v1032
          %v1034 = vrcp.pop %v978
          %v1035 = vmul.f32 1.0, %v1034
          %v1036 = vrcp.pop %v979
          %v1037 = vmul.f32 1.0, %v1036
          %v1038 = vrcp.pop %v980
          %v1039 = vmul.f32 1.0, %v1038
          %v1040 = vrcp.pop %v981
          %v1041 = vmul.f32 1.0, %v1040
          %v1042 = vrcp.pop %v982
          %v1043 = vmul.f32 1.0, %v1042
          %v1044 = vrcp.pop %v983
          %v1045 = vmul.f32 1.0, %v1044
          %v1046 = vrcp.pop %v984
          %v1047 = vmul.f32 1.0, %v1046
          %v1048 = vrcp.pop %v985
          %v1049 = vmul.f32 1.0, %v1048
          %v1050 = vmul.f32 %v667, %v987
          %v1051 = vmul.f32 %v669, %v989
          %v1052 = vmul.f32 %v671, %v991
          %v1053 = vmul.f32 %v673, %v993
          %v1054 = vmul.f32 %v677, %v995
          %v1055 = vmul.f32 %v679, %v997
          %v1056 = vmul.f32 %v681, %v999
          %v1057 = vmul.f32 %v683, %v1001
          %v1058 = vmul.f32 %v687, %v1003
          %v1059 = vmul.f32 %v689, %v1005
          %v1060 = vmul.f32 %v691, %v1007
          %v1061 = vmul.f32 %v693, %v1009
          %v1062 = vmul.f32 %v697, %v1011
          %v1063 = vmul.f32 %v699, %v1013
          %v1064 = vmul.f32 %v701, %v1015
          %v1065 = vmul.f32 %v703, %v1017
          %v1066 = vmul.f32 %v707, %v1019
          %v1067 = vmul.f32 %v709, %v1021
          %v1068 = vmul.f32 %v711, %v1023
          %v1069 = vmul.f32 %v713, %v1025
          %v1070 = vmul.f32 %v717, %v1027
          %v1071 = vmul.f32 %v719, %v1029
          %v1072 = vmul.f32 %v721, %v1031
          %v1073 = vmul.f32 %v723, %v1033
          %v1074 = vmul.f32 %v727, %v1035
          %v1075 = vmul.f32 %v729, %v1037
          %v1076 = vmul.f32 %v731, %v1039
          %v1077 = vmul.f32 %v733, %v1041
          %v1078 = vmul.f32 %v737, %v1043
          %v1079 = vmul.f32 %v739, %v1045
          %v1080 = vmul.f32 %v741, %v1047
          %v1081 = vmul.f32 %v743, %v1049
          %v1082 = vmul.f32 %v1050, %v780
          %v1083 = vmul.f32 %v1051, %v782
          %v1084 = vmul.f32 %v1052, %v784
          %v1085 = vmul.f32 %v1053, %v786
          %v1086 = vmul.f32 %v1054, %v790
          %v1087 = vmul.f32 %v1055, %v792
          %v1088 = vmul.f32 %v1056, %v794
          %v1089 = vmul.f32 %v1057, %v796
          %v1090 = vmul.f32 %v1058, %v800
          %v1091 = vmul.f32 %v1059, %v802
          %v1092 = vmul.f32 %v1060, %v804
          %v1093 = vmul.f32 %v1061, %v806
          %v1094 = vmul.f32 %v1062, %v810
          %v1095 = vmul.f32 %v1063, %v812
          %v1096 = vmul.f32 %v1064, %v814
          %v1097 = vmul.f32 %v1065, %v816
          %v1098 = vmul.f32 %v1066, %v820
          %v1099 = vmul.f32 %v1067, %v822
          %v1100 = vmul.f32 %v1068, %v824
          %v1101 = vmul.f32 %v1069, %v826
          %v1102 = vmul.f32 %v1070, %v830
          %v1103 = vmul.f32 %v1071, %v832
          %v1104 = vmul.f32 %v1072, %v834
          %v1105 = vmul.f32 %v1073, %v836
          %v1106 = vmul.f32 %v1074, %v840
          %v1107 = vmul.f32 %v1075, %v842
          %v1108 = vmul.f32 %v1076, %v844
          %v1109 = vmul.f32 %v1077, %v846
          %v1110 = vmul.f32 %v1078, %v850
          %v1111 = vmul.f32 %v1079, %v852
          %v1112 = vmul.f32 %v1080, %v854
          %v1113 = vmul.f32 %v1081, %v856
          %v1114 = vld [vmem:[%s338] sm:$0xff]
          %v1115 = vld [vmem:[%s338 + $0x8] sm:$0xff]
          %v1116 = vld [vmem:[%s338 + $0x10] sm:$0xff]
          %v1117 = vld [vmem:[%s338 + $0x18] sm:$0xff]
          %v1118 = vld [vmem:[%s338 + $0x20] sm:$0xff]
          %v1119 = vld [vmem:[%s338 + $0x28] sm:$0xff]
          %v1120 = vld [vmem:[%s338 + $0x30] sm:$0xff]
          %v1121 = vld [vmem:[%s338 + $0x38] sm:$0xff]
          %v1122 = vld [vmem:[%s338 + $0x40] sm:$0xff]
          %v1123 = vld [vmem:[%s338 + $0x48] sm:$0xff]
          %v1124 = vld [vmem:[%s338 + $0x50] sm:$0xff]
          %v1125 = vld [vmem:[%s338 + $0x58] sm:$0xff]
          %v1126 = vld [vmem:[%s338 + $0x60] sm:$0xff]
          %v1127 = vld [vmem:[%s338 + $0x68] sm:$0xff]
          %v1128 = vld [vmem:[%s338 + $0x70] sm:$0xff]
          %v1129 = vld [vmem:[%s338 + $0x78] sm:$0xff]
          %1131 = vset.pattern.permute.xlu0 0
          %1132 = vperm.xlu0 %1131, %v1114
          %v1133 = vpop.permute.xlu0 %1132
          %1136 = vset.pattern.permute.xlu0 0
          %1137 = vperm.xlu0 %1136, %v1115
          %v1138 = vpop.permute.xlu0 %1137
          %1141 = vset.pattern.permute.xlu0 0
          %1142 = vperm.xlu0 %1141, %v1116
          %v1143 = vpop.permute.xlu0 %1142
          %1146 = vset.pattern.permute.xlu0 0
          %1147 = vperm.xlu0 %1146, %v1117
          %v1148 = vpop.permute.xlu0 %1147
          %1151 = vset.pattern.permute.xlu0 0
          %1152 = vperm.xlu0 %1151, %v1118
          %v1153 = vpop.permute.xlu0 %1152
          %1156 = vset.pattern.permute.xlu0 0
          %1157 = vperm.xlu0 %1156, %v1119
          %v1158 = vpop.permute.xlu0 %1157
          %1161 = vset.pattern.permute.xlu0 0
          %1162 = vperm.xlu0 %1161, %v1120
          %v1163 = vpop.permute.xlu0 %1162
          %1166 = vset.pattern.permute.xlu0 0
          %1167 = vperm.xlu0 %1166, %v1121
          %v1168 = vpop.permute.xlu0 %1167
          %1171 = vset.pattern.permute.xlu0 0
          %1172 = vperm.xlu0 %1171, %v1122
          %v1173 = vpop.permute.xlu0 %1172
          %1176 = vset.pattern.permute.xlu0 0
          %1177 = vperm.xlu0 %1176, %v1123
          %v1178 = vpop.permute.xlu0 %1177
          %1181 = vset.pattern.permute.xlu0 0
          %1182 = vperm.xlu0 %1181, %v1124
          %v1183 = vpop.permute.xlu0 %1182
          %1186 = vset.pattern.permute.xlu0 0
          %1187 = vperm.xlu0 %1186, %v1125
          %v1188 = vpop.permute.xlu0 %1187
          %1191 = vset.pattern.permute.xlu0 0
          %1192 = vperm.xlu0 %1191, %v1126
          %v1193 = vpop.permute.xlu0 %1192
          %1196 = vset.pattern.permute.xlu0 0
          %1197 = vperm.xlu0 %1196, %v1127
          %v1198 = vpop.permute.xlu0 %1197
          %1201 = vset.pattern.permute.xlu0 0
          %1202 = vperm.xlu0 %1201, %v1128
          %v1203 = vpop.permute.xlu0 %1202
          %1206 = vset.pattern.permute.xlu0 0
          %1207 = vperm.xlu0 %1206, %v1129
          %v1208 = vpop.permute.xlu0 %1207
          %v1210 = vmul.f32 %v1082, %v1133
          %v1211 = vmul.f32 %v1083, %v1133
          %v1212 = vmul.f32 %v1084, %v1138
          %v1213 = vmul.f32 %v1085, %v1138
          %v1214 = vmul.f32 %v1086, %v1143
          %v1215 = vmul.f32 %v1087, %v1143
          %v1216 = vmul.f32 %v1088, %v1148
          %v1217 = vmul.f32 %v1089, %v1148
          %v1218 = vmul.f32 %v1090, %v1153
          %v1219 = vmul.f32 %v1091, %v1153
          %v1220 = vmul.f32 %v1092, %v1158
          %v1221 = vmul.f32 %v1093, %v1158
          %v1222 = vmul.f32 %v1094, %v1163
          %v1223 = vmul.f32 %v1095, %v1163
          %v1224 = vmul.f32 %v1096, %v1168
          %v1225 = vmul.f32 %v1097, %v1168
          %v1226 = vmul.f32 %v1098, %v1173
          %v1227 = vmul.f32 %v1099, %v1173
          %v1228 = vmul.f32 %v1100, %v1178
          %v1229 = vmul.f32 %v1101, %v1178
          %v1230 = vmul.f32 %v1102, %v1183
          %v1231 = vmul.f32 %v1103, %v1183
          %v1232 = vmul.f32 %v1104, %v1188
          %v1233 = vmul.f32 %v1105, %v1188
          %v1234 = vmul.f32 %v1106, %v1193
          %v1235 = vmul.f32 %v1107, %v1193
          %v1236 = vmul.f32 %v1108, %v1198
          %v1237 = vmul.f32 %v1109, %v1198
          %v1238 = vmul.f32 %v1110, %v1203
          %v1239 = vmul.f32 %v1111, %v1203
          %v1240 = vmul.f32 %v1112, %v1208
          %v1241 = vmul.f32 %v1113, %v1208
          %v1242 = vld [vmem:[#allocation2] sm:$0xff]
          %v1243 = vld [vmem:[#allocation2 + $0x8] sm:$0xff]
          %v1244 = vld [vmem:[#allocation2 + $0x10] sm:$0xff]
          %v1245 = vld [vmem:[#allocation2 + $0x18] sm:$0xff]
          %v1246 = vld [vmem:[#allocation2 + $0x20] sm:$0xff]
          %v1247 = vld [vmem:[#allocation2 + $0x28] sm:$0xff]
          %v1248 = vld [vmem:[#allocation2 + $0x30] sm:$0xff]
          %v1249 = vld [vmem:[#allocation2 + $0x38] sm:$0xff]
          %v1250 = vld [vmem:[#allocation2 + $0x40] sm:$0xff]
          %v1251 = vld [vmem:[#allocation2 + $0x48] sm:$0xff]
          %v1252 = vld [vmem:[#allocation2 + $0x50] sm:$0xff]
          %v1253 = vld [vmem:[#allocation2 + $0x58] sm:$0xff]
          %v1254 = vld [vmem:[#allocation2 + $0x60] sm:$0xff]
          %v1255 = vld [vmem:[#allocation2 + $0x68] sm:$0xff]
          %v1256 = vld [vmem:[#allocation2 + $0x70] sm:$0xff]
          %v1257 = vld [vmem:[#allocation2 + $0x78] sm:$0xff]
          %v1258 = vpack.c.bf16 %v1212, %v1210
          %v1259 = vpack.c.bf16 %v1213, %v1211
          %v1260 = vpack.c.bf16 %v1216, %v1214
          %v1261 = vpack.c.bf16 %v1217, %v1215
          %v1262 = vpack.c.bf16 %v1220, %v1218
          %v1263 = vpack.c.bf16 %v1221, %v1219
          %v1264 = vpack.c.bf16 %v1224, %v1222
          %v1265 = vpack.c.bf16 %v1225, %v1223
          %v1266 = vpack.c.bf16 %v1228, %v1226
          %v1267 = vpack.c.bf16 %v1229, %v1227
          %v1268 = vpack.c.bf16 %v1232, %v1230
          %v1269 = vpack.c.bf16 %v1233, %v1231
          %v1270 = vpack.c.bf16 %v1236, %v1234
          %v1271 = vpack.c.bf16 %v1237, %v1235
          %v1272 = vpack.c.bf16 %v1240, %v1238
          %v1273 = vpack.c.bf16 %v1241, %v1239
          %v1274 = vld [vmem:[%s328] sm:$0xf]
          %v1275 = vld [vmem:[%s328 + $0x4] sm:$0xf]
          %v1276 = vld [vmem:[%s328 + $0x8] sm:$0xf]
          %v1277 = vld [vmem:[%s328 + $0xc] sm:$0xf]
          %v1278 = vld [vmem:[%s328 + $0x10] sm:$0xf]
          %v1279 = vld [vmem:[%s328 + $0x14] sm:$0xf]
          %v1280 = vld [vmem:[%s328 + $0x18] sm:$0xf]
          %v1281 = vld [vmem:[%s328 + $0x1c] sm:$0xf]
          %v1282 = vld [vmem:[%s328 + $0x20] sm:$0xf]
          %v1283 = vld [vmem:[%s328 + $0x24] sm:$0xf]
          %v1284 = vld [vmem:[%s328 + $0x28] sm:$0xf]
          %v1285 = vld [vmem:[%s328 + $0x2c] sm:$0xf]
          %v1286 = vld [vmem:[%s328 + $0x30] sm:$0xf]
          %v1287 = vld [vmem:[%s328 + $0x34] sm:$0xf]
          %v1288 = vld [vmem:[%s328 + $0x38] sm:$0xf]
          %v1289 = vld [vmem:[%s328 + $0x3c] sm:$0xf]
          %v1290 = vld [vmem:[%s328 + $0x40] sm:$0xf]
          %v1291 = vld [vmem:[%s328 + $0x44] sm:$0xf]
          %v1292 = vld [vmem:[%s328 + $0x48] sm:$0xf]
          %v1293 = vld [vmem:[%s328 + $0x4c] sm:$0xf]
          %v1294 = vld [vmem:[%s328 + $0x50] sm:$0xf]
          %v1295 = vld [vmem:[%s328 + $0x54] sm:$0xf]
          %v1296 = vld [vmem:[%s328 + $0x58] sm:$0xf]
          %v1297 = vld [vmem:[%s328 + $0x5c] sm:$0xf]
          %v1298 = vld [vmem:[%s328 + $0x60] sm:$0xf]
          %v1299 = vld [vmem:[%s328 + $0x64] sm:$0xf]
          %v1300 = vld [vmem:[%s328 + $0x68] sm:$0xf]
          %v1301 = vld [vmem:[%s328 + $0x6c] sm:$0xf]
          %v1302 = vld [vmem:[%s328 + $0x70] sm:$0xf]
          %v1303 = vld [vmem:[%s328 + $0x74] sm:$0xf]
          %v1304 = vld [vmem:[%s328 + $0x78] sm:$0xf]
          %v1305 = vld [vmem:[%s328 + $0x7c] sm:$0xf]
          %v1338 = vunpack.c.l.b16 %v1274
          %v1339 = vunpack.c.l.b16 %v1275
          %v1340 = vunpack.c.l.b16 %v1276
          %v1341 = vunpack.c.l.b16 %v1277
          %v1342 = vunpack.c.l.b16 %v1278
          %v1343 = vunpack.c.l.b16 %v1279
          %v1344 = vunpack.c.l.b16 %v1280
          %v1345 = vunpack.c.l.b16 %v1281
          %v1346 = vunpack.c.l.b16 %v1282
          %v1347 = vunpack.c.l.b16 %v1283
          %v1348 = vunpack.c.l.b16 %v1284
          %v1349 = vunpack.c.l.b16 %v1285
          %v1350 = vunpack.c.l.b16 %v1286
          %v1351 = vunpack.c.l.b16 %v1287
          %v1352 = vunpack.c.l.b16 %v1288
          %v1353 = vunpack.c.l.b16 %v1289
          %v1354 = vunpack.c.l.b16 %v1290
          %v1355 = vunpack.c.l.b16 %v1291
          %v1356 = vunpack.c.l.b16 %v1292
          %v1357 = vunpack.c.l.b16 %v1293
          %v1358 = vunpack.c.l.b16 %v1294
          %v1359 = vunpack.c.l.b16 %v1295
          %v1360 = vunpack.c.l.b16 %v1296
          %v1361 = vunpack.c.l.b16 %v1297
          %v1362 = vunpack.c.l.b16 %v1298
          %v1363 = vunpack.c.l.b16 %v1299
          %v1364 = vunpack.c.l.b16 %v1300
          %v1365 = vunpack.c.l.b16 %v1301
          %v1366 = vunpack.c.l.b16 %v1302
          %v1367 = vunpack.c.l.b16 %v1303
          %v1368 = vunpack.c.l.b16 %v1304
          %v1369 = vunpack.c.l.b16 %v1305
          %v1370 = vpack.c.b16 %v1339, %v1338
          %v1371 = vpack.c.b16 %v1341, %v1340
          %v1372 = vpack.c.b16 %v1343, %v1342
          %v1373 = vpack.c.b16 %v1345, %v1344
          %v1374 = vpack.c.b16 %v1347, %v1346
          %v1375 = vpack.c.b16 %v1349, %v1348
          %v1376 = vpack.c.b16 %v1351, %v1350
          %v1377 = vpack.c.b16 %v1353, %v1352
          %v1378 = vpack.c.b16 %v1355, %v1354
          %v1379 = vpack.c.b16 %v1357, %v1356
          %v1380 = vpack.c.b16 %v1359, %v1358
          %v1381 = vpack.c.b16 %v1361, %v1360
          %v1382 = vpack.c.b16 %v1363, %v1362
          %v1383 = vpack.c.b16 %v1365, %v1364
          %v1384 = vpack.c.b16 %v1367, %v1366
          %v1385 = vpack.c.b16 %v1369, %v1368
          %1402 = vmatprep.subr.bf16.mxu0 0
          %1403 = vmatpush1.bf16.msra.mxu0 %v1370
          %1404 = vmatprep.subr.bf16.mxu0 0
          %1405 = vmatpush1.bf16.msra.mxu0 %v1371
          %1406 = vmatprep.subr.bf16.mxu0 0
          %1407 = vmatpush1.bf16.msra.mxu0 %v1372
          %1408 = vmatprep.subr.bf16.mxu0 0
          %1409 = vmatpush1.bf16.msra.mxu0 %v1373
          %1410 = vmatprep.subr.bf16.mxu0 0
          %1411 = vmatpush1.bf16.msra.mxu0 %v1374
          %1412 = vmatprep.subr.bf16.mxu0 0
          %1413 = vmatpush1.bf16.msra.mxu0 %v1375
          %1414 = vmatprep.subr.bf16.mxu0 0
          %1415 = vmatpush1.bf16.msra.mxu0 %v1376
          %1416 = vmatprep.subr.bf16.mxu0 0
          %1417 = vmatpush1.bf16.msra.mxu0 %v1377
          %1418 = vmatprep.subr.bf16.mxu0 0
          %1419 = vmatpush1.bf16.msra.mxu0 %v1378
          %1420 = vmatprep.subr.bf16.mxu0 0
          %1421 = vmatpush1.bf16.msra.mxu0 %v1379
          %1422 = vmatprep.subr.bf16.mxu0 0
          %1423 = vmatpush1.bf16.msra.mxu0 %v1380
          %1424 = vmatprep.subr.bf16.mxu0 0
          %1425 = vmatpush1.bf16.msra.mxu0 %v1381
          %1426 = vmatprep.subr.bf16.mxu0 0
          %1427 = vmatpush1.bf16.msra.mxu0 %v1382
          %1428 = vmatprep.subr.bf16.mxu0 0
          %1429 = vmatpush1.bf16.msra.mxu0 %v1383
          %1430 = vmatprep.subr.bf16.mxu0 0
          %1431 = vmatpush1.bf16.msra.mxu0 %v1384
          %1432 = vmatprep.subr.bf16.mxu0 0
          %1433 = vmatpush1.bf16.msra.mxu0 %v1385
          %1434 = vmatprep.mubr.bf16.mxu0 %v1259
          %1435 = vmatmul.mubr.bf16.gmra.mrb[0].mxu0 %v1258
          %v1436 = vpop.f32.mrb[0].mxu0
          %v1437 = vadd.f32 0.0, %v1436
          %v1438 = vpop.f32.mrb[0].mxu0
          %v1439 = vpop.f32.mrb[0].mxu0
          %v1440 = vadd.f32 0.0, %v1439
          %v1441 = vpop.f32.mrb[0].mxu0
          %1442 = vmatprep.mubr.bf16.mxu0 %v1261
          %1443 = vmatmul.mubr.bf16.gmra.mrb[0].mxu0 %v1260
          %v1444 = vpop.f32.mrb[0].mxu0
          %v1445 = vadd.f32 0.0, %v1444
          %v1446 = vpop.f32.mrb[0].mxu0
          %v1447 = vpop.f32.mrb[0].mxu0
          %v1448 = vadd.f32 0.0, %v1447
          %v1449 = vpop.f32.mrb[0].mxu0
          %1450 = vmatprep.mubr.bf16.mxu0 %v1263
          %1451 = vmatmul.mubr.bf16.gmra.mrb[0].mxu0 %v1262
          %v1452 = vpop.f32.mrb[0].mxu0
          %v1453 = vadd.f32 0.0, %v1452
          %v1454 = vpop.f32.mrb[0].mxu0
          %v1455 = vpop.f32.mrb[0].mxu0
          %v1456 = vadd.f32 0.0, %v1455
          %v1457 = vpop.f32.mrb[0].mxu0
          %1458 = vmatprep.mubr.bf16.mxu0 %v1265
          %1459 = vmatmul.mubr.bf16.gmra.mrb[0].mxu0 %v1264
          %v1460 = vpop.f32.mrb[0].mxu0
          %v1461 = vadd.f32 0.0, %v1460
          %v1462 = vpop.f32.mrb[0].mxu0
          %v1463 = vpop.f32.mrb[0].mxu0
          %v1464 = vadd.f32 0.0, %v1463
          %v1465 = vpop.f32.mrb[0].mxu0
          %1466 = vmatprep.mubr.bf16.mxu0 %v1267
          %1467 = vmatmul.mubr.bf16.gmra.mrb[0].mxu0 %v1266
          %v1468 = vpop.f32.mrb[0].mxu0
          %v1469 = vadd.f32 0.0, %v1468
          %v1470 = vpop.f32.mrb[0].mxu0
          %v1471 = vpop.f32.mrb[0].mxu0
          %v1472 = vadd.f32 0.0, %v1471
          %v1473 = vpop.f32.mrb[0].mxu0
          %1474 = vmatprep.mubr.bf16.mxu0 %v1269
          %1475 = vmatmul.mubr.bf16.gmra.mrb[0].mxu0 %v1268
          %v1476 = vpop.f32.mrb[0].mxu0
          %v1477 = vadd.f32 0.0, %v1476
          %v1478 = vpop.f32.mrb[0].mxu0
          %v1479 = vpop.f32.mrb[0].mxu0
          %v1480 = vadd.f32 0.0, %v1479
          %v1481 = vpop.f32.mrb[0].mxu0
          %1482 = vmatprep.mubr.bf16.mxu0 %v1271
          %1483 = vmatmul.mubr.bf16.gmra.mrb[0].mxu0 %v1270
          %v1484 = vpop.f32.mrb[0].mxu0
          %v1485 = vadd.f32 0.0, %v1484
          %v1486 = vpop.f32.mrb[0].mxu0
          %v1487 = vpop.f32.mrb[0].mxu0
          %v1488 = vadd.f32 0.0, %v1487
          %v1489 = vpop.f32.mrb[0].mxu0
          %1490 = vmatprep.mubr.bf16.mxu0 %v1273
          %1491 = vmatmul.mubr.bf16.gmra.mrb[0].mxu0 %v1272
          %v1492 = vpop.f32.mrb[0].mxu0
          %v1493 = vadd.f32 0.0, %v1492
          %v1494 = vpop.f32.mrb[0].mxu0
          %v1495 = vpop.f32.mrb[0].mxu0
          %v1496 = vadd.f32 0.0, %v1495
          %v1497 = vpop.f32.mrb[0].mxu0
          %1498 = vdwg.mxu0
          %v1499 = vadd.f32 %v1242, %v1437
          %v1500 = vadd.f32 %v1243, %v1440
          %v1501 = vadd.f32 %v1244, %v1445
          %v1502 = vadd.f32 %v1245, %v1448
          %v1503 = vadd.f32 %v1246, %v1453
          %v1504 = vadd.f32 %v1247, %v1456
          %v1505 = vadd.f32 %v1248, %v1461
          %v1506 = vadd.f32 %v1249, %v1464
          %v1507 = vadd.f32 %v1250, %v1469
          %v1508 = vadd.f32 %v1251, %v1472
          %v1509 = vadd.f32 %v1252, %v1477
          %v1510 = vadd.f32 %v1253, %v1480
          %v1511 = vadd.f32 %v1254, %v1485
          %v1512 = vadd.f32 %v1255, %v1488
          %v1513 = vadd.f32 %v1256, %v1493
          %v1514 = vadd.f32 %v1257, %v1496
          %1515 = vst [vmem:[#allocation2] sm:$0xff] %v1499
          %1516 = vst [vmem:[#allocation2 + $0x8] sm:$0xff] %v1500
          %1517 = vst [vmem:[#allocation2 + $0x10] sm:$0xff] %v1501
          %1518 = vst [vmem:[#allocation2 + $0x18] sm:$0xff] %v1502
          %1519 = vst [vmem:[#allocation2 + $0x20] sm:$0xff] %v1503
          %1520 = vst [vmem:[#allocation2 + $0x28] sm:$0xff] %v1504
          %1521 = vst [vmem:[#allocation2 + $0x30] sm:$0xff] %v1505
          %1522 = vst [vmem:[#allocation2 + $0x38] sm:$0xff] %v1506
          %1523 = vst [vmem:[#allocation2 + $0x40] sm:$0xff] %v1507
          %1524 = vst [vmem:[#allocation2 + $0x48] sm:$0xff] %v1508
          %1525 = vst [vmem:[#allocation2 + $0x50] sm:$0xff] %v1509
          %1526 = vst [vmem:[#allocation2 + $0x58] sm:$0xff] %v1510
          %1527 = vst [vmem:[#allocation2 + $0x60] sm:$0xff] %v1511
          %1528 = vst [vmem:[#allocation2 + $0x68] sm:$0xff] %v1512
          %1529 = vst [vmem:[#allocation2 + $0x70] sm:$0xff] %v1513
          %1530 = vst [vmem:[#allocation2 + $0x78] sm:$0xff] %v1514
        $region48: #{mixtral_moe.3} parent=35 // pred_fallthru
          _
        %p1531 = scmp.eq.s32.totalorder %s34, 7
        %p1532 = scmp.eq.s32.totalorder %s35, 1
        %p1533 = pnand %p1531, %p1532
        %p1534 = pneg %p1533
        // Predicated region
        $region49: #{mixtral_moe.3} parent=35 // pred_check
          _
        $region50: #{mixtral_moe.3} parent=35 // pred_check_branch
          %1536 = sbr.rel (%p1533) target = $region52
        $region51: #{mixtral_moe.3} parent=35 // pred_region
          %v1537 = vld [vmem:[#allocation2] sm:$0xff]
          %v1538 = vld [vmem:[#allocation2 + $0x8] sm:$0xff]
          %v1539 = vld [vmem:[#allocation2 + $0x10] sm:$0xff]
          %v1540 = vld [vmem:[#allocation2 + $0x18] sm:$0xff]
          %v1541 = vld [vmem:[#allocation2 + $0x20] sm:$0xff]
          %v1542 = vld [vmem:[#allocation2 + $0x28] sm:$0xff]
          %v1543 = vld [vmem:[#allocation2 + $0x30] sm:$0xff]
          %v1544 = vld [vmem:[#allocation2 + $0x38] sm:$0xff]
          %v1545 = vld [vmem:[#allocation2 + $0x40] sm:$0xff]
          %v1546 = vld [vmem:[#allocation2 + $0x48] sm:$0xff]
          %v1547 = vld [vmem:[#allocation2 + $0x50] sm:$0xff]
          %v1548 = vld [vmem:[#allocation2 + $0x58] sm:$0xff]
          %v1549 = vld [vmem:[#allocation2 + $0x60] sm:$0xff]
          %v1550 = vld [vmem:[#allocation2 + $0x68] sm:$0xff]
          %v1551 = vld [vmem:[#allocation2 + $0x70] sm:$0xff]
          %v1552 = vld [vmem:[#allocation2 + $0x78] sm:$0xff]
          %1553 = vst [vmem:[%s313] sm:$0xff] %v1537
          %1554 = vst [vmem:[%s313 + $0x8] sm:$0xff] %v1538
          %1555 = vst [vmem:[%s313 + $0x10] sm:$0xff] %v1539
          %1556 = vst [vmem:[%s313 + $0x18] sm:$0xff] %v1540
          %1557 = vst [vmem:[%s313 + $0x20] sm:$0xff] %v1541
          %1558 = vst [vmem:[%s313 + $0x28] sm:$0xff] %v1542
          %1559 = vst [vmem:[%s313 + $0x30] sm:$0xff] %v1543
          %1560 = vst [vmem:[%s313 + $0x38] sm:$0xff] %v1544
          %1561 = vst [vmem:[%s313 + $0x40] sm:$0xff] %v1545
          %1562 = vst [vmem:[%s313 + $0x48] sm:$0xff] %v1546
          %1563 = vst [vmem:[%s313 + $0x50] sm:$0xff] %v1547
          %1564 = vst [vmem:[%s313 + $0x58] sm:$0xff] %v1548
          %1565 = vst [vmem:[%s313 + $0x60] sm:$0xff] %v1549
          %1566 = vst [vmem:[%s313 + $0x68] sm:$0xff] %v1550
          %1567 = vst [vmem:[%s313 + $0x70] sm:$0xff] %v1551
          %1568 = vst [vmem:[%s313 + $0x78] sm:$0xff] %v1552
        $region52: #{mixtral_moe.3} parent=35 // pred_fallthru
          _
        %s1569 = sand.u32 %s165, 1
        %s1570 = scalar_lea.sflag [#allocation7], %s1569
        %s1571 = sand.u32 %s165, 1
        %s1572 = smul.addr %s1571, 128
        %s1573 = scalar_lea.vmem [#allocation8], %s1572
        // Predicated region
        $region53: #{mixtral_moe.3} parent=35 // pred_check
          %p1574 = pneg %p175
        $region54: #{mixtral_moe.3} parent=35 // pred_check_branch
          %1576 = sbr.rel (%p1574) target = $region56
        $region55: #{mixtral_moe.3} parent=35 // pred_region
          %s1577 = smul.u32 16, %s33
          %s1579 = ssub.s32 2048, 2048
          %1580 = vsyncadd %s1570, %s1579
          %s1581 = smul.addr %s1577, 128
          %s1582 = scalar_lea.hbm %s5, %s1581
          %s1583 = sshll.u32 %s1573, 4
          %s1584 = int_to_ptr.vmem [resolvable:$true] %s1583
          %1589 = dma.vmem_to_hbm [thread:$0]  %s1584, 2048, %s1582, %s1570, 128, 128, 8
        $region56: #{mixtral_moe.3} parent=35 // pred_fallthru
          _
      $region36: #{mixtral_moe.3} parent=5 // pred_fallthru
        _
      %p1590 = scmp.le.s32.totalorder 2, %s23
      // Predicated region
      $region57: #{mixtral_moe.3} parent=5 // pred_check
        %p1591 = pneg %p1590
      $region58: #{mixtral_moe.3} parent=5 // pred_check_branch
        %1593 = sbr.rel (%p1591) target = $region60
      $region59: #{mixtral_moe.3} parent=5 // pred_region
        %s1594 = ssub.s32 %s23, 2
        // Predicated region
        $region61: #{mixtral_moe.3} parent=59 // pred_check
          %p1595 = pneg %p181
        $region62: #{mixtral_moe.3} parent=59 // pred_check_branch
          %1597 = sbr.rel (%p1595) target = $region64
        $region63: #{mixtral_moe.3} parent=59 // pred_region
          %s1598 = sand.u32 %s166, 1
          %s1599 = scalar_lea.sflag [#allocation7], %s1598
          %s1600 = sand.u32 %s166, 1
          %s1601 = smul.addr %s1600, 128
          %s1602 = scalar_lea.vmem [#allocation8], %s1601
          %1603 = dma.done %s1599, 2048
        $region64: #{mixtral_moe.3} parent=59 // pred_fallthru
          _
      $region60: #{mixtral_moe.3} parent=5 // pred_fallthru
        _
    $region6: #{mixtral_moe.3} parent=1 // loop_footer
      %s27 = sadd.s32 1, %s23
    $region7: #{mixtral_moe.3} parent=1 // loop_footer_branch
      %22 = sbr.rel target = $region3
    $region8: #{mixtral_moe.3} parent=1 // loop_exit
      _
    %1604 = vsyncpa [#allocation6], 1
    %s1605 = scalar_lea.sflag [#allocation6], 1
    %1606 = vsyncpa %s1605, 1
    %1607 = vsyncpa [#allocation7], 1
    %s1608 = scalar_lea.sflag [#allocation7], 1
    %1609 = vsyncpa %s1608, 1

</llo_original>
